<compile_context>
chip_gen: v7x
topology: tpu7x:2x2x1
jax: 0.10.0
libtpu: 0.0.40
codegen_flags: <defaults>
</compile_context>

<pallas_src>
import jax
import jax.numpy as jnp
from jax import lax
from jax.experimental import pallas as pl
from jax.experimental.pallas import tpu as pltpu

# ---- FiLMGen hyperparameters (small, TPU-friendly instantiation) -----------
INPUT_DIM         = 16    # input_dim
HIDDEN_DIM        = 32    # hidden_dim
NUM_MODULES       = 1     # num_modules  (T_out)
MODULE_NUM_LAYERS = 1     # module_num_layers
MODULE_DIM        = 4     # module_dim
COND_FEAT_SIZE    = 2 * MODULE_DIM * MODULE_NUM_LAYERS      # V_out
OUT_DIM           = NUM_MODULES * COND_FEAT_SIZE            # decoder_linear out features

BATCH = 2
SEQ   = 8
N_PAD = 8                 # batch padded to one full sublane tile


# ---------------------------------------------------------------------------
# Pallas kernel factory: fused encoder-GRU + decoder-GRU + decoder_linear.
# All weights are pre-transposed / gate-concatenated / kron-block-diagonalized
# and biases pre-folded in the wrapper, so the loop body is exactly 2 MXU
# pushes per time step plus elementwise gate math.
# ---------------------------------------------------------------------------
def _make_filmgen_kernel(T, NP, H):
    H2, H3, H4 = 2 * H, 3 * H, 4 * H

    def kernel(x_ref, w_ei_ref, b_ei_ref, w_eh_ref, b_eh_ref,
               w_d_ref, b_d_ref, w_o_ref, b_o_ref, out_ref):
        # ---- Hoisted encoder input projection: ALL T steps in one MXU issue
        # through the block-diagonal (T*D, T*3H) weight. Gate biases
        # (b_ih_rz + b_hh_rz, b_ih_n) are already folded into b_ei.
        gi_e = (jnp.dot(x_ref[...], w_ei_ref[...],
                        preferred_element_type=jnp.float32)
                + b_ei_ref[...])                                    # (NP, T*3H)

        # Weights / broadcast biases hoisted out of the unrolled recurrence.
        w_eh = w_eh_ref[...]                                        # (H, 3H)
        b_eh = jnp.broadcast_to(b_eh_ref[...], (NP, H3))            # [0, 0, b_hh_n]
        w_d  = w_d_ref[...]                                         # (2H, 4H)
        b_d  = jnp.broadcast_to(b_d_ref[...], (NP, H4))             # [rz, gi_n, gh_n] biases

        h_enc = jnp.zeros((NP, H), jnp.float32)                     # PyTorch zero init
        h_dec = jnp.zeros((NP, H), jnp.float32)
        h_dec_steps = []                                            # stays in vregs

        # ---- Fully unrolled recurrence (T static & tiny) --------------------
        for t in range(T):
            # Encoder GRU cell (PyTorch gate order [r, z, n]); 1 fused matmul.
            g_e = jnp.dot(h_enc, w_eh, preferred_element_type=jnp.float32) + b_eh
            gi  = gi_e[:, t * H3:(t + 1) * H3]
            rz  = jax.nn.sigmoid(gi[:, :H2] + g_e[:, :H2])          # 1 EUP push
            r, z = rz[:, :H], rz[:, H:]
            n   = jnp.tanh(gi[:, H2:] + r * g_e[:, H2:])
            h_enc = (1.0 - z) * n + z * h_enc

            # Decoder GRU cell: input(=h_enc)+hidden projections fused into ONE
            # matmul; rz sum happens inside the MXU accumulation, gi_n / gh_n
            # land in disjoint lane ranges.
            g_d = (jnp.dot(jnp.concatenate([h_enc, h_dec], axis=1), w_d,
                           preferred_element_type=jnp.float32) + b_d)   # (NP, 4H)
            rz  = jax.nn.sigmoid(g_d[:, :H2])
            r, z = rz[:, :H], rz[:, H:]
            n   = jnp.tanh(g_d[:, H2:H3] + r * g_d[:, H3:])
            h_dec = (1.0 - z) * n + z * h_dec
            h_dec_steps.append(h_dec)                               # no VMEM store

        # ---- Deferred decoder_linear: one block-diag matmul + one store -----
        # Output columns are pre-permuted to [all gammas | all betas] so the
        # wrapper never transposes.
        h_wide = jnp.concatenate(h_dec_steps, axis=1)               # (NP, T*H)
        out_ref[...] = (jnp.dot(h_wide, w_o_ref[...],
                                preferred_element_type=jnp.float32)
                        + b_o_ref[...])                             # (NP, 2*T*MD)

    return kernel


# ---------------------------------------------------------------------------
# One-time weight fusion (outside the jitted forward).
# ---------------------------------------------------------------------------
def _split_gru(w_ih, w_hh, b_ih, b_hh, H):
    """PyTorch GRU params (gate order [r,z,n]) -> transposed gate blocks."""
    wih_t, whh_t = w_ih.T, w_hh.T
    return (wih_t[:, :2 * H], wih_t[:, 2 * H:],
            whh_t[:, :2 * H], whh_t[:, 2 * H:],
            b_ih[:2 * H], b_ih[2 * H:], b_hh[:2 * H], b_hh[2 * H:])


def prepare_params(params):
    """Gate-concat, block-diagonalize, fold biases. Exact algebraic rewrite."""
    # TODO(synk): num_modules > 1 / module_num_layers > 1 (encoded.expand/view)
    # and output_batchnorm paths not implemented; identities for this config.
    assert NUM_MODULES == 1 and MODULE_NUM_LAYERS == 1
    H, T, MD, OUT = HIDDEN_DIM, SEQ, MODULE_DIM, OUT_DIM
    eyeT = jnp.eye(T, dtype=jnp.float32)

    # Encoder: hoisted block-diag input projection + fused hidden projection.
    wih_rz, wih_n, whh_rz, whh_n, bih_rz, bih_n, bhh_rz, bhh_n = _split_gru(
        params["w_ih_enc"], params["w_hh_enc"],
        params["b_ih_enc"], params["b_hh_enc"], H)
    w_e_in = jnp.concatenate([wih_rz, wih_n], axis=1)               # (D, 3H)
    b_e_in = jnp.concatenate([bih_rz + bhh_rz, bih_n])              # (3H,)
    w_ei = jnp.kron(eyeT, w_e_in)                                   # (T*D, T*3H)
    b_ei = jnp.tile(b_e_in, T).reshape(1, -1)                       # (1, T*3H)
    w_eh = jnp.concatenate([whh_rz, whh_n], axis=1)                 # (H, 3H)
    b_eh = jnp.concatenate([jnp.zeros((2 * H,), jnp.float32),
                            bhh_n]).reshape(1, -1)                  # (1, 3H)

    # Decoder: fuse input(=h_enc) and hidden projections into one (2H,4H)
    # weight with columns [rz_fused | gi_n | gh_n]; fold all biases.
    dih_rz, dih_n, dhh_rz, dhh_n, dbih_rz, dbih_n, dbhh_rz, dbhh_n = _split_gru(
        params["w_ih_dec"], params["w_hh_dec"],
        params["b_ih_dec"], params["b_hh_dec"], H)
    zHH = jnp.zeros((H, H), jnp.float32)
    w_d = jnp.concatenate([
        jnp.concatenate([dih_rz, dih_n, zHH], axis=1),   # rows fed by h_enc
        jnp.concatenate([dhh_rz, zHH, dhh_n], axis=1),   # rows fed by h_dec
    ], axis=0)                                           # (2H, 4H)
    b_d = jnp.concatenate([dbih_rz + dbhh_rz, dbih_n, dbhh_n]).reshape(1, -1)

    # decoder_linear: block-diag over time, columns regrouped so the kernel
    # emits [all gammas | all betas] in final batch-major memory order.
    w_big = jnp.kron(eyeT, params["w_lin"].T)            # (T*H, T*OUT)
    b_big = jnp.tile(params["b_lin"], T)                 # (T*OUT,)
    t_off = jnp.arange(T)[:, None] * OUT
    m_idx = jnp.arange(MD)[None, :]
    gamma_cols = (t_off + m_idx).reshape(-1)
    beta_cols  = (t_off + MD + m_idx).reshape(-1)
    perm = jnp.concatenate([gamma_cols, beta_cols])
    w_o = w_big[:, perm]                                 # (T*H, 2*T*MD)
    b_o = b_big[perm].reshape(1, -1)                     # (1, 2*T*MD)

    return (w_ei, b_ei, w_eh, b_eh, w_d, b_d, w_o, b_o)


# ---------------------------------------------------------------------------
# Forward: reshape+pad x, one pallas_call, contiguous slices/reshapes out.
# ---------------------------------------------------------------------------
def filmgen_forward(x, prepped):
    """x: (N, T, INPUT_DIM) float32 (batch-first, as in the PyTorch module)."""
    N, T, D = x.shape
    MD = MODULE_DIM

    # Batch-major, sublane-padded input: (N_PAD, T*D) = one (8,128) tile.
    # (contiguous reshape + zero-row pad; no transposes on the data path)
    x_flat = jnp.pad(x.reshape(N, T * D), ((0, N_PAD - N), (0, 0)))

    vmem = pl.BlockSpec(memory_space=pltpu.MemorySpace.VMEM)
    gb = pl.pallas_call(
        _make_filmgen_kernel(T, N_PAD, HIDDEN_DIM),
        out_shape=jax.ShapeDtypeStruct((N_PAD, 2 * T * MD), jnp.float32),
        in_specs=[vmem] * (1 + len(prepped)),
        out_specs=vmem,
    )(x_flat, *prepped)

    # Columns are already grouped [gammas | betas]; just drop batch padding
    # and reshape (both contiguous).
    gammas = gb[:N, :T * MD].reshape(N, T, MD)
    betas  = gb[:N, T * MD:].reshape(N, T, MD)
    return gammas, betas


# ---------------------------------------------------------------------------
# Pure-JAX reference (un-fused weights) for a correctness cross-check.
# ---------------------------------------------------------------------------
def _gru_ref(x_tm, wih, whh, bih, bhh):
    H = whh.shape[1]

    def cell(h, x_t):
        gi = x_t @ wih.T + bih
        gh = h @ whh.T + bhh
        r = jax.nn.sigmoid(gi[:, :H] + gh[:, :H])
        z = jax.nn.sigmoid(gi[:, H:2 * H] + gh[:, H:2 * H])
        n = jnp.tanh(gi[:, 2 * H:] + r * gh[:, 2 * H:])
        h = (1.0 - z) * n + z * h
        return h, h

    h0 = jnp.zeros((x_tm.shape[1], H), jnp.float32)
    _, out = lax.scan(cell, h0, x_tm)
    return out                                                  # (T, N, H)


def filmgen_reference(x, params):
    x_tm = jnp.transpose(x, (1, 0, 2))
    enc = _gru_ref(x_tm, params["w_ih_enc"], params["w_hh_enc"],
                   params["b_ih_enc"], params["b_hh_enc"])
    dec = _gru_ref(enc, params["w_ih_dec"], params["w_hh_dec"],
                   params["b_ih_dec"], params["b_hh_dec"])
    lin = dec @ params["w_lin"].T + params["b_lin"]
    lin = jnp.transpose(lin, (1, 0, 2))
    sliced = lin[:, :, :2 * MODULE_DIM]
    return sliced[:, :, :MODULE_DIM], sliced[:, :, MODULE_DIM:]


# ---------------------------------------------------------------------------
def init_params(key):
    """Deterministic synthetic parameters matching PyTorch GRU/Linear shapes."""
    H, D, O = HIDDEN_DIM, INPUT_DIM, OUT_DIM
    ks = jax.random.split(key, 11)
    u = lambda k, shape, scale: jax.random.uniform(
        k, shape, jnp.float32, minval=-scale, maxval=scale)
    s = 1.0 / jnp.sqrt(H)
    return {
        # encoder GRU: weight_ih_l0 (3H, D), weight_hh_l0 (3H, H), biases (3H,)
        "w_ih_enc": u(ks[0], (3 * H, D), s), "w_hh_enc": u(ks[1], (3 * H, H), s),
        "b_ih_enc": u(ks[2], (3 * H,), s),   "b_hh_enc": u(ks[3], (3 * H,), s),
        # decoder GRU: (3H, H) / (3H, H)
        "w_ih_dec": u(ks[4], (3 * H, H), s), "w_hh_dec": u(ks[5], (3 * H, H), s),
        "b_ih_dec": u(ks[6], (3 * H,), s),   "b_hh_dec": u(ks[7], (3 * H,), s),
        # decoder_linear: (num_modules*cond_feat_size, H)
        "w_lin": u(ks[8], (O, H), jnp.sqrt(6.0 / H)),
        "b_lin": u(ks[9], (O,), s),
    }


if __name__ == "__main__":
    key = jax.random.PRNGKey(0)
    k_param, k_x = jax.random.split(key)
    params = init_params(k_param)
    x = jax.random.normal(k_x, (BATCH, SEQ, INPUT_DIM), dtype=jnp.float32)

    # One-time weight fusion (amortized across calls in a real model).
    prepped = prepare_params(params)

    fwd = jax.jit(filmgen_forward)
    gammas, betas = fwd(x, prepped)
    jax.block_until_ready((gammas, betas))

    g_ref, b_ref = filmgen_reference(x, params)
    assert gammas.shape == (BATCH, SEQ, MODULE_DIM)
    assert betas.shape == (BATCH, SEQ, MODULE_DIM)
    assert jnp.allclose(gammas, g_ref, atol=1e-3, rtol=1e-3)
    assert jnp.allclose(betas, b_ref, atol=1e-3, rtol=1e-3)

    print("KERNEL_OK")
</pallas_src>

<mosaic_0001>
module attributes {stable_mosaic.version = 11 : i64} {
  func.func @kernel(%arg0: memref<8x128xf32, #tpu.memory_space<vmem>>, %arg1: memref<128x768xf32, #tpu.memory_space<vmem>>, %arg2: memref<1x768xf32, #tpu.memory_space<vmem>>, %arg3: memref<32x96xf32, #tpu.memory_space<vmem>>, %arg4: memref<1x96xf32, #tpu.memory_space<vmem>>, %arg5: memref<64x128xf32, #tpu.memory_space<vmem>>, %arg6: memref<1x128xf32, #tpu.memory_space<vmem>>, %arg7: memref<256x64xf32, #tpu.memory_space<vmem>>, %arg8: memref<1x64xf32, #tpu.memory_space<vmem>>, %arg9: memref<8x64xf32, #tpu.memory_space<vmem>>) attributes {dimension_semantics = [], scalar_prefetch = 0 : i64, scratch_operands = 0 : i64, tpu.core_type = #tpu.core_type<tc>} {
    %c0 = arith.constant 0 : index
    %c0_0 = arith.constant 0 : index
    %0 = vector.load %arg0[%c0, %c0_0] : memref<8x128xf32, #tpu.memory_space<vmem>>, vector<8x128xf32>
    %c0_1 = arith.constant 0 : index
    %c0_2 = arith.constant 0 : index
    %1 = vector.load %arg1[%c0_1, %c0_2] : memref<128x768xf32, #tpu.memory_space<vmem>>, vector<128x768xf32>
    %cst = arith.constant dense<0.000000e+00> : vector<8x768xf32>
    %2 = tpu.matmul %0, %1, %cst {dimension_numbers = #tpu.dot_dimension_numbers<[1], [0], [0], [1], [0, 0, 1, 1], [], []>} : vector<8x128xf32>, vector<128x768xf32>, vector<8x768xf32> -> vector<8x768xf32>
    %c0_3 = arith.constant 0 : index
    %c0_4 = arith.constant 0 : index
    %3 = vector.load %arg2[%c0_3, %c0_4] : memref<1x768xf32, #tpu.memory_space<vmem>>, vector<1x768xf32>
    %4 = vector.broadcast %3 : vector<1x768xf32> to vector<8x768xf32>
    %5 = arith.addf %2, %4 : vector<8x768xf32>
    %c0_5 = arith.constant 0 : index
    %c0_6 = arith.constant 0 : index
    %6 = vector.load %arg3[%c0_5, %c0_6] : memref<32x96xf32, #tpu.memory_space<vmem>>, vector<32x96xf32>
    %c0_7 = arith.constant 0 : index
    %c0_8 = arith.constant 0 : index
    %7 = vector.load %arg4[%c0_7, %c0_8] : memref<1x96xf32, #tpu.memory_space<vmem>>, vector<1x96xf32>
    %8 = vector.shape_cast %7 : vector<1x96xf32> to vector<1x96xf32>
    %9 = vector.broadcast %8 : vector<1x96xf32> to vector<8x96xf32>
    %c0_9 = arith.constant 0 : index
    %c0_10 = arith.constant 0 : index
    %10 = vector.load %arg5[%c0_9, %c0_10] : memref<64x128xf32, #tpu.memory_space<vmem>>, vector<64x128xf32>
    %c0_11 = arith.constant 0 : index
    %c0_12 = arith.constant 0 : index
    %11 = vector.load %arg6[%c0_11, %c0_12] : memref<1x128xf32, #tpu.memory_space<vmem>>, vector<1x128xf32>
    %12 = vector.shape_cast %11 : vector<1x128xf32> to vector<1x128xf32>
    %13 = vector.broadcast %12 : vector<1x128xf32> to vector<8x128xf32>
    %cst_13 = arith.constant 0.000000e+00 : f32
    %14 = vector.broadcast %cst_13 : f32 to vector<8x32xf32>
    %cst_14 = arith.constant 0.000000e+00 : f32
    %15 = vector.broadcast %cst_14 : f32 to vector<8x32xf32>
    %cst_15 = arith.constant dense<0.000000e+00> : vector<8x96xf32>
    %16 = tpu.matmul %14, %6, %cst_15 {dimension_numbers = #tpu.dot_dimension_numbers<[1], [0], [0], [1], [0, 0, 1, 1], [], []>} : vector<8x32xf32>, vector<32x96xf32>, vector<8x96xf32> -> vector<8x96xf32>
    %17 = arith.addf %16, %9 : vector<8x96xf32>
    %18 = vector.extract_strided_slice %5 {offsets = [0, 0], sizes = [8, 96], strides = [1, 1]} : vector<8x768xf32> to vector<8x96xf32>
    %19 = vector.extract_strided_slice %18 {offsets = [0, 0], sizes = [8, 64], strides = [1, 1]} : vector<8x96xf32> to vector<8x64xf32>
    %20 = vector.extract_strided_slice %17 {offsets = [0, 0], sizes = [8, 64], strides = [1, 1]} : vector<8x96xf32> to vector<8x64xf32>
    %21 = arith.addf %19, %20 : vector<8x64xf32>
    %22 = arith.negf %21 : vector<8x64xf32>
    %23 = math.exp %22 : vector<8x64xf32>
    %cst_16 = arith.constant 1.000000e+00 : f32
    %24 = vector.broadcast %cst_16 : f32 to vector<8x64xf32>
    %25 = arith.addf %24, %23 : vector<8x64xf32>
    %26 = arith.divf %24, %25 : vector<8x64xf32>
    %27 = vector.extract_strided_slice %26 {offsets = [0, 0], sizes = [8, 32], strides = [1, 1]} : vector<8x64xf32> to vector<8x32xf32>
    %28 = vector.extract_strided_slice %26 {offsets = [0, 32], sizes = [8, 32], strides = [1, 1]} : vector<8x64xf32> to vector<8x32xf32>
    %29 = vector.extract_strided_slice %18 {offsets = [0, 64], sizes = [8, 32], strides = [1, 1]} : vector<8x96xf32> to vector<8x32xf32>
    %30 = vector.extract_strided_slice %17 {offsets = [0, 64], sizes = [8, 32], strides = [1, 1]} : vector<8x96xf32> to vector<8x32xf32>
    %31 = arith.mulf %27, %30 : vector<8x32xf32>
    %32 = arith.addf %29, %31 : vector<8x32xf32>
    %33 = math.tanh %32 : vector<8x32xf32>
    %cst_17 = arith.constant 1.000000e+00 : f32
    %34 = vector.broadcast %cst_17 : f32 to vector<8x32xf32>
    %35 = arith.subf %34, %28 : vector<8x32xf32>
    %36 = arith.mulf %35, %33 : vector<8x32xf32>
    %37 = arith.mulf %28, %14 : vector<8x32xf32>
    %38 = arith.addf %36, %37 : vector<8x32xf32>
    %39 = tpu.concatenate %38, %15 in 1 : vector<8x32xf32>, vector<8x32xf32> -> vector<8x64xf32>
    %cst_18 = arith.constant dense<0.000000e+00> : vector<8x128xf32>
    %40 = tpu.matmul %39, %10, %cst_18 {dimension_numbers = #tpu.dot_dimension_numbers<[1], [0], [0], [1], [0, 0, 1, 1], [], []>} : vector<8x64xf32>, vector<64x128xf32>, vector<8x128xf32> -> vector<8x128xf32>
    %41 = arith.addf %40, %13 : vector<8x128xf32>
    %42 = vector.extract_strided_slice %41 {offsets = [0, 0], sizes = [8, 64], strides = [1, 1]} : vector<8x128xf32> to vector<8x64xf32>
    %43 = arith.negf %42 : vector<8x64xf32>
    %44 = math.exp %43 : vector<8x64xf32>
    %cst_19 = arith.constant 1.000000e+00 : f32
    %45 = vector.broadcast %cst_19 : f32 to vector<8x64xf32>
    %46 = arith.addf %45, %44 : vector<8x64xf32>
    %47 = arith.divf %45, %46 : vector<8x64xf32>
    %48 = vector.extract_strided_slice %47 {offsets = [0, 0], sizes = [8, 32], strides = [1, 1]} : vector<8x64xf32> to vector<8x32xf32>
    %49 = vector.extract_strided_slice %47 {offsets = [0, 32], sizes = [8, 32], strides = [1, 1]} : vector<8x64xf32> to vector<8x32xf32>
    %50 = vector.extract_strided_slice %41 {offsets = [0, 64], sizes = [8, 32], strides = [1, 1]} : vector<8x128xf32> to vector<8x32xf32>
    %51 = vector.extract_strided_slice %41 {offsets = [0, 96], sizes = [8, 32], strides = [1, 1]} : vector<8x128xf32> to vector<8x32xf32>
    %52 = arith.mulf %48, %51 : vector<8x32xf32>
    %53 = arith.addf %50, %52 : vector<8x32xf32>
    %54 = math.tanh %53 : vector<8x32xf32>
    %cst_20 = arith.constant 1.000000e+00 : f32
    %55 = vector.broadcast %cst_20 : f32 to vector<8x32xf32>
    %56 = arith.subf %55, %49 : vector<8x32xf32>
    %57 = arith.mulf %56, %54 : vector<8x32xf32>
    %58 = arith.mulf %49, %15 : vector<8x32xf32>
    %59 = arith.addf %57, %58 : vector<8x32xf32>
    %cst_21 = arith.constant dense<0.000000e+00> : vector<8x96xf32>
    %60 = tpu.matmul %38, %6, %cst_21 {dimension_numbers = #tpu.dot_dimension_numbers<[1], [0], [0], [1], [0, 0, 1, 1], [], []>} : vector<8x32xf32>, vector<32x96xf32>, vector<8x96xf32> -> vector<8x96xf32>
    %61 = arith.addf %60, %9 : vector<8x96xf32>
    %62 = vector.extract_strided_slice %5 {offsets = [0, 96], sizes = [8, 96], strides = [1, 1]} : vector<8x768xf32> to vector<8x96xf32>
    %63 = vector.extract_strided_slice %62 {offsets = [0, 0], sizes = [8, 64], strides = [1, 1]} : vector<8x96xf32> to vector<8x64xf32>
    %64 = vector.extract_strided_slice %61 {offsets = [0, 0], sizes = [8, 64], strides = [1, 1]} : vector<8x96xf32> to vector<8x64xf32>
    %65 = arith.addf %63, %64 : vector<8x64xf32>
    %66 = arith.negf %65 : vector<8x64xf32>
    %67 = math.exp %66 : vector<8x64xf32>
    %cst_22 = arith.constant 1.000000e+00 : f32
    %68 = vector.broadcast %cst_22 : f32 to vector<8x64xf32>
    %69 = arith.addf %68, %67 : vector<8x64xf32>
    %70 = arith.divf %68, %69 : vector<8x64xf32>
    %71 = vector.extract_strided_slice %70 {offsets = [0, 0], sizes = [8, 32], strides = [1, 1]} : vector<8x64xf32> to vector<8x32xf32>
    %72 = vector.extract_strided_slice %70 {offsets = [0, 32], sizes = [8, 32], strides = [1, 1]} : vector<8x64xf32> to vector<8x32xf32>
    %73 = vector.extract_strided_slice %62 {offsets = [0, 64], sizes = [8, 32], strides = [1, 1]} : vector<8x96xf32> to vector<8x32xf32>
    %74 = vector.extract_strided_slice %61 {offsets = [0, 64], sizes = [8, 32], strides = [1, 1]} : vector<8x96xf32> to vector<8x32xf32>
    %75 = arith.mulf %71, %74 : vector<8x32xf32>
    %76 = arith.addf %73, %75 : vector<8x32xf32>
    %77 = math.tanh %76 : vector<8x32xf32>
    %cst_23 = arith.constant 1.000000e+00 : f32
    %78 = vector.broadcast %cst_23 : f32 to vector<8x32xf32>
    %79 = arith.subf %78, %72 : vector<8x32xf32>
    %80 = arith.mulf %79, %77 : vector<8x32xf32>
    %81 = arith.mulf %72, %38 : vector<8x32xf32>
    %82 = arith.addf %80, %81 : vector<8x32xf32>
    %83 = tpu.concatenate %82, %59 in 1 : vector<8x32xf32>, vector<8x32xf32> -> vector<8x64xf32>
    %cst_24 = arith.constant dense<0.000000e+00> : vector<8x128xf32>
    %84 = tpu.matmul %83, %10, %cst_24 {dimension_numbers = #tpu.dot_dimension_numbers<[1], [0], [0], [1], [0, 0, 1, 1], [], []>} : vector<8x64xf32>, vector<64x128xf32>, vector<8x128xf32> -> vector<8x128xf32>
    %85 = arith.addf %84, %13 : vector<8x128xf32>
    %86 = vector.extract_strided_slice %85 {offsets = [0, 0], sizes = [8, 64], strides = [1, 1]} : vector<8x128xf32> to vector<8x64xf32>
    %87 = arith.negf %86 : vector<8x64xf32>
    %88 = math.exp %87 : vector<8x64xf32>
    %cst_25 = arith.constant 1.000000e+00 : f32
    %89 = vector.broadcast %cst_25 : f32 to vector<8x64xf32>
    %90 = arith.addf %89, %88 : vector<8x64xf32>
    %91 = arith.divf %89, %90 : vector<8x64xf32>
    %92 = vector.extract_strided_slice %91 {offsets = [0, 0], sizes = [8, 32], strides = [1, 1]} : vector<8x64xf32> to vector<8x32xf32>
    %93 = vector.extract_strided_slice %91 {offsets = [0, 32], sizes = [8, 32], strides = [1, 1]} : vector<8x64xf32> to vector<8x32xf32>
    %94 = vector.extract_strided_slice %85 {offsets = [0, 64], sizes = [8, 32], strides = [1, 1]} : vector<8x128xf32> to vector<8x32xf32>
    %95 = vector.extract_strided_slice %85 {offsets = [0, 96], sizes = [8, 32], strides = [1, 1]} : vector<8x128xf32> to vector<8x32xf32>
    %96 = arith.mulf %92, %95 : vector<8x32xf32>
    %97 = arith.addf %94, %96 : vector<8x32xf32>
    %98 = math.tanh %97 : vector<8x32xf32>
    %cst_26 = arith.constant 1.000000e+00 : f32
    %99 = vector.broadcast %cst_26 : f32 to vector<8x32xf32>
    %100 = arith.subf %99, %93 : vector<8x32xf32>
    %101 = arith.mulf %100, %98 : vector<8x32xf32>
    %102 = arith.mulf %93, %59 : vector<8x32xf32>
    %103 = arith.addf %101, %102 : vector<8x32xf32>
    %cst_27 = arith.constant dense<0.000000e+00> : vector<8x96xf32>
    %104 = tpu.matmul %82, %6, %cst_27 {dimension_numbers = #tpu.dot_dimension_numbers<[1], [0], [0], [1], [0, 0, 1, 1], [], []>} : vector<8x32xf32>, vector<32x96xf32>, vector<8x96xf32> -> vector<8x96xf32>
    %105 = arith.addf %104, %9 : vector<8x96xf32>
    %106 = vector.extract_strided_slice %5 {offsets = [0, 192], sizes = [8, 96], strides = [1, 1]} : vector<8x768xf32> to vector<8x96xf32>
    %107 = vector.extract_strided_slice %106 {offsets = [0, 0], sizes = [8, 64], strides = [1, 1]} : vector<8x96xf32> to vector<8x64xf32>
    %108 = vector.extract_strided_slice %105 {offsets = [0, 0], sizes = [8, 64], strides = [1, 1]} : vector<8x96xf32> to vector<8x64xf32>
    %109 = arith.addf %107, %108 : vector<8x64xf32>
    %110 = arith.negf %109 : vector<8x64xf32>
    %111 = math.exp %110 : vector<8x64xf32>
    %cst_28 = arith.constant 1.000000e+00 : f32
    %112 = vector.broadcast %cst_28 : f32 to vector<8x64xf32>
    %113 = arith.addf %112, %111 : vector<8x64xf32>
    %114 = arith.divf %112, %113 : vector<8x64xf32>
    %115 = vector.extract_strided_slice %114 {offsets = [0, 0], sizes = [8, 32], strides = [1, 1]} : vector<8x64xf32> to vector<8x32xf32>
    %116 = vector.extract_strided_slice %114 {offsets = [0, 32], sizes = [8, 32], strides = [1, 1]} : vector<8x64xf32> to vector<8x32xf32>
    %117 = vector.extract_strided_slice %106 {offsets = [0, 64], sizes = [8, 32], strides = [1, 1]} : vector<8x96xf32> to vector<8x32xf32>
    %118 = vector.extract_strided_slice %105 {offsets = [0, 64], sizes = [8, 32], strides = [1, 1]} : vector<8x96xf32> to vector<8x32xf32>
    %119 = arith.mulf %115, %118 : vector<8x32xf32>
    %120 = arith.addf %117, %119 : vector<8x32xf32>
    %121 = math.tanh %120 : vector<8x32xf32>
    %cst_29 = arith.constant 1.000000e+00 : f32
    %122 = vector.broadcast %cst_29 : f32 to vector<8x32xf32>
    %123 = arith.subf %122, %116 : vector<8x32xf32>
    %124 = arith.mulf %123, %121 : vector<8x32xf32>
    %125 = arith.mulf %116, %82 : vector<8x32xf32>
    %126 = arith.addf %124, %125 : vector<8x32xf32>
    %127 = tpu.concatenate %126, %103 in 1 : vector<8x32xf32>, vector<8x32xf32> -> vector<8x64xf32>
    %cst_30 = arith.constant dense<0.000000e+00> : vector<8x128xf32>
    %128 = tpu.matmul %127, %10, %cst_30 {dimension_numbers = #tpu.dot_dimension_numbers<[1], [0], [0], [1], [0, 0, 1, 1], [], []>} : vector<8x64xf32>, vector<64x128xf32>, vector<8x128xf32> -> vector<8x128xf32>
    %129 = arith.addf %128, %13 : vector<8x128xf32>
    %130 = vector.extract_strided_slice %129 {offsets = [0, 0], sizes = [8, 64], strides = [1, 1]} : vector<8x128xf32> to vector<8x64xf32>
    %131 = arith.negf %130 : vector<8x64xf32>
    %132 = math.exp %131 : vector<8x64xf32>
    %cst_31 = arith.constant 1.000000e+00 : f32
    %133 = vector.broadcast %cst_31 : f32 to vector<8x64xf32>
    %134 = arith.addf %133, %132 : vector<8x64xf32>
    %135 = arith.divf %133, %134 : vector<8x64xf32>
    %136 = vector.extract_strided_slice %135 {offsets = [0, 0], sizes = [8, 32], strides = [1, 1]} : vector<8x64xf32> to vector<8x32xf32>
    %137 = vector.extract_strided_slice %135 {offsets = [0, 32], sizes = [8, 32], strides = [1, 1]} : vector<8x64xf32> to vector<8x32xf32>
    %138 = vector.extract_strided_slice %129 {offsets = [0, 64], sizes = [8, 32], strides = [1, 1]} : vector<8x128xf32> to vector<8x32xf32>
    %139 = vector.extract_strided_slice %129 {offsets = [0, 96], sizes = [8, 32], strides = [1, 1]} : vector<8x128xf32> to vector<8x32xf32>
    %140 = arith.mulf %136, %139 : vector<8x32xf32>
    %141 = arith.addf %138, %140 : vector<8x32xf32>
    %142 = math.tanh %141 : vector<8x32xf32>
    %cst_32 = arith.constant 1.000000e+00 : f32
    %143 = vector.broadcast %cst_32 : f32 to vector<8x32xf32>
    %144 = arith.subf %143, %137 : vector<8x32xf32>
    %145 = arith.mulf %144, %142 : vector<8x32xf32>
    %146 = arith.mulf %137, %103 : vector<8x32xf32>
    %147 = arith.addf %145, %146 : vector<8x32xf32>
    %cst_33 = arith.constant dense<0.000000e+00> : vector<8x96xf32>
    %148 = tpu.matmul %126, %6, %cst_33 {dimension_numbers = #tpu.dot_dimension_numbers<[1], [0], [0], [1], [0, 0, 1, 1], [], []>} : vector<8x32xf32>, vector<32x96xf32>, vector<8x96xf32> -> vector<8x96xf32>
    %149 = arith.addf %148, %9 : vector<8x96xf32>
    %150 = vector.extract_strided_slice %5 {offsets = [0, 288], sizes = [8, 96], strides = [1, 1]} : vector<8x768xf32> to vector<8x96xf32>
    %151 = vector.extract_strided_slice %150 {offsets = [0, 0], sizes = [8, 64], strides = [1, 1]} : vector<8x96xf32> to vector<8x64xf32>
    %152 = vector.extract_strided_slice %149 {offsets = [0, 0], sizes = [8, 64], strides = [1, 1]} : vector<8x96xf32> to vector<8x64xf32>
    %153 = arith.addf %151, %152 : vector<8x64xf32>
    %154 = arith.negf %153 : vector<8x64xf32>
    %155 = math.exp %154 : vector<8x64xf32>
    %cst_34 = arith.constant 1.000000e+00 : f32
    %156 = vector.broadcast %cst_34 : f32 to vector<8x64xf32>
    %157 = arith.addf %156, %155 : vector<8x64xf32>
    %158 = arith.divf %156, %157 : vector<8x64xf32>
    %159 = vector.extract_strided_slice %158 {offsets = [0, 0], sizes = [8, 32], strides = [1, 1]} : vector<8x64xf32> to vector<8x32xf32>
    %160 = vector.extract_strided_slice %158 {offsets = [0, 32], sizes = [8, 32], strides = [1, 1]} : vector<8x64xf32> to vector<8x32xf32>
    %161 = vector.extract_strided_slice %150 {offsets = [0, 64], sizes = [8, 32], strides = [1, 1]} : vector<8x96xf32> to vector<8x32xf32>
    %162 = vector.extract_strided_slice %149 {offsets = [0, 64], sizes = [8, 32], strides = [1, 1]} : vector<8x96xf32> to vector<8x32xf32>
    %163 = arith.mulf %159, %162 : vector<8x32xf32>
    %164 = arith.addf %161, %163 : vector<8x32xf32>
    %165 = math.tanh %164 : vector<8x32xf32>
    %cst_35 = arith.constant 1.000000e+00 : f32
    %166 = vector.broadcast %cst_35 : f32 to vector<8x32xf32>
    %167 = arith.subf %166, %160 : vector<8x32xf32>
    %168 = arith.mulf %167, %165 : vector<8x32xf32>
    %169 = arith.mulf %160, %126 : vector<8x32xf32>
    %170 = arith.addf %168, %169 : vector<8x32xf32>
    %171 = tpu.concatenate %170, %147 in 1 : vector<8x32xf32>, vector<8x32xf32> -> vector<8x64xf32>
    %cst_36 = arith.constant dense<0.000000e+00> : vector<8x128xf32>
    %172 = tpu.matmul %171, %10, %cst_36 {dimension_numbers = #tpu.dot_dimension_numbers<[1], [0], [0], [1], [0, 0, 1, 1], [], []>} : vector<8x64xf32>, vector<64x128xf32>, vector<8x128xf32> -> vector<8x128xf32>
    %173 = arith.addf %172, %13 : vector<8x128xf32>
    %174 = vector.extract_strided_slice %173 {offsets = [0, 0], sizes = [8, 64], strides = [1, 1]} : vector<8x128xf32> to vector<8x64xf32>
    %175 = arith.negf %174 : vector<8x64xf32>
    %176 = math.exp %175 : vector<8x64xf32>
    %cst_37 = arith.constant 1.000000e+00 : f32
    %177 = vector.broadcast %cst_37 : f32 to vector<8x64xf32>
    %178 = arith.addf %177, %176 : vector<8x64xf32>
    %179 = arith.divf %177, %178 : vector<8x64xf32>
    %180 = vector.extract_strided_slice %179 {offsets = [0, 0], sizes = [8, 32], strides = [1, 1]} : vector<8x64xf32> to vector<8x32xf32>
    %181 = vector.extract_strided_slice %179 {offsets = [0, 32], sizes = [8, 32], strides = [1, 1]} : vector<8x64xf32> to vector<8x32xf32>
    %182 = vector.extract_strided_slice %173 {offsets = [0, 64], sizes = [8, 32], strides = [1, 1]} : vector<8x128xf32> to vector<8x32xf32>
    %183 = vector.extract_strided_slice %173 {offsets = [0, 96], sizes = [8, 32], strides = [1, 1]} : vector<8x128xf32> to vector<8x32xf32>
    %184 = arith.mulf %180, %183 : vector<8x32xf32>
    %185 = arith.addf %182, %184 : vector<8x32xf32>
    %186 = math.tanh %185 : vector<8x32xf32>
    %cst_38 = arith.constant 1.000000e+00 : f32
    %187 = vector.broadcast %cst_38 : f32 to vector<8x32xf32>
    %188 = arith.subf %187, %181 : vector<8x32xf32>
    %189 = arith.mulf %188, %186 : vector<8x32xf32>
    %190 = arith.mulf %181, %147 : vector<8x32xf32>
    %191 = arith.addf %189, %190 : vector<8x32xf32>
    %cst_39 = arith.constant dense<0.000000e+00> : vector<8x96xf32>
    %192 = tpu.matmul %170, %6, %cst_39 {dimension_numbers = #tpu.dot_dimension_numbers<[1], [0], [0], [1], [0, 0, 1, 1], [], []>} : vector<8x32xf32>, vector<32x96xf32>, vector<8x96xf32> -> vector<8x96xf32>
    %193 = arith.addf %192, %9 : vector<8x96xf32>
    %194 = vector.extract_strided_slice %5 {offsets = [0, 384], sizes = [8, 96], strides = [1, 1]} : vector<8x768xf32> to vector<8x96xf32>
    %195 = vector.extract_strided_slice %194 {offsets = [0, 0], sizes = [8, 64], strides = [1, 1]} : vector<8x96xf32> to vector<8x64xf32>
    %196 = vector.extract_strided_slice %193 {offsets = [0, 0], sizes = [8, 64], strides = [1, 1]} : vector<8x96xf32> to vector<8x64xf32>
    %197 = arith.addf %195, %196 : vector<8x64xf32>
    %198 = arith.negf %197 : vector<8x64xf32>
    %199 = math.exp %198 : vector<8x64xf32>
    %cst_40 = arith.constant 1.000000e+00 : f32
    %200 = vector.broadcast %cst_40 : f32 to vector<8x64xf32>
    %201 = arith.addf %200, %199 : vector<8x64xf32>
    %202 = arith.divf %200, %201 : vector<8x64xf32>
    %203 = vector.extract_strided_slice %202 {offsets = [0, 0], sizes = [8, 32], strides = [1, 1]} : vector<8x64xf32> to vector<8x32xf32>
    %204 = vector.extract_strided_slice %202 {offsets = [0, 32], sizes = [8, 32], strides = [1, 1]} : vector<8x64xf32> to vector<8x32xf32>
    %205 = vector.extract_strided_slice %194 {offsets = [0, 64], sizes = [8, 32], strides = [1, 1]} : vector<8x96xf32> to vector<8x32xf32>
    %206 = vector.extract_strided_slice %193 {offsets = [0, 64], sizes = [8, 32], strides = [1, 1]} : vector<8x96xf32> to vector<8x32xf32>
    %207 = arith.mulf %203, %206 : vector<8x32xf32>
    %208 = arith.addf %205, %207 : vector<8x32xf32>
    %209 = math.tanh %208 : vector<8x32xf32>
    %cst_41 = arith.constant 1.000000e+00 : f32
    %210 = vector.broadcast %cst_41 : f32 to vector<8x32xf32>
    %211 = arith.subf %210, %204 : vector<8x32xf32>
    %212 = arith.mulf %211, %209 : vector<8x32xf32>
    %213 = arith.mulf %204, %170 : vector<8x32xf32>
    %214 = arith.addf %212, %213 : vector<8x32xf32>
    %215 = tpu.concatenate %214, %191 in 1 : vector<8x32xf32>, vector<8x32xf32> -> vector<8x64xf32>
    %cst_42 = arith.constant dense<0.000000e+00> : vector<8x128xf32>
    %216 = tpu.matmul %215, %10, %cst_42 {dimension_numbers = #tpu.dot_dimension_numbers<[1], [0], [0], [1], [0, 0, 1, 1], [], []>} : vector<8x64xf32>, vector<64x128xf32>, vector<8x128xf32> -> vector<8x128xf32>
    %217 = arith.addf %216, %13 : vector<8x128xf32>
    %218 = vector.extract_strided_slice %217 {offsets = [0, 0], sizes = [8, 64], strides = [1, 1]} : vector<8x128xf32> to vector<8x64xf32>
    %219 = arith.negf %218 : vector<8x64xf32>
    %220 = math.exp %219 : vector<8x64xf32>
    %cst_43 = arith.constant 1.000000e+00 : f32
    %221 = vector.broadcast %cst_43 : f32 to vector<8x64xf32>
    %222 = arith.addf %221, %220 : vector<8x64xf32>
    %223 = arith.divf %221, %222 : vector<8x64xf32>
    %224 = vector.extract_strided_slice %223 {offsets = [0, 0], sizes = [8, 32], strides = [1, 1]} : vector<8x64xf32> to vector<8x32xf32>
    %225 = vector.extract_strided_slice %223 {offsets = [0, 32], sizes = [8, 32], strides = [1, 1]} : vector<8x64xf32> to vector<8x32xf32>
    %226 = vector.extract_strided_slice %217 {offsets = [0, 64], sizes = [8, 32], strides = [1, 1]} : vector<8x128xf32> to vector<8x32xf32>
    %227 = vector.extract_strided_slice %217 {offsets = [0, 96], sizes = [8, 32], strides = [1, 1]} : vector<8x128xf32> to vector<8x32xf32>
    %228 = arith.mulf %224, %227 : vector<8x32xf32>
    %229 = arith.addf %226, %228 : vector<8x32xf32>
    %230 = math.tanh %229 : vector<8x32xf32>
    %cst_44 = arith.constant 1.000000e+00 : f32
    %231 = vector.broadcast %cst_44 : f32 to vector<8x32xf32>
    %232 = arith.subf %231, %225 : vector<8x32xf32>
    %233 = arith.mulf %232, %230 : vector<8x32xf32>
    %234 = arith.mulf %225, %191 : vector<8x32xf32>
    %235 = arith.addf %233, %234 : vector<8x32xf32>
    %cst_45 = arith.constant dense<0.000000e+00> : vector<8x96xf32>
    %236 = tpu.matmul %214, %6, %cst_45 {dimension_numbers = #tpu.dot_dimension_numbers<[1], [0], [0], [1], [0, 0, 1, 1], [], []>} : vector<8x32xf32>, vector<32x96xf32>, vector<8x96xf32> -> vector<8x96xf32>
    %237 = arith.addf %236, %9 : vector<8x96xf32>
    %238 = vector.extract_strided_slice %5 {offsets = [0, 480], sizes = [8, 96], strides = [1, 1]} : vector<8x768xf32> to vector<8x96xf32>
    %239 = vector.extract_strided_slice %238 {offsets = [0, 0], sizes = [8, 64], strides = [1, 1]} : vector<8x96xf32> to vector<8x64xf32>
    %240 = vector.extract_strided_slice %237 {offsets = [0, 0], sizes = [8, 64], strides = [1, 1]} : vector<8x96xf32> to vector<8x64xf32>
    %241 = arith.addf %239, %240 : vector<8x64xf32>
    %242 = arith.negf %241 : vector<8x64xf32>
    %243 = math.exp %242 : vector<8x64xf32>
    %cst_46 = arith.constant 1.000000e+00 : f32
    %244 = vector.broadcast %cst_46 : f32 to vector<8x64xf32>
    %245 = arith.addf %244, %243 : vector<8x64xf32>
    %246 = arith.divf %244, %245 : vector<8x64xf32>
    %247 = vector.extract_strided_slice %246 {offsets = [0, 0], sizes = [8, 32], strides = [1, 1]} : vector<8x64xf32> to vector<8x32xf32>
    %248 = vector.extract_strided_slice %246 {offsets = [0, 32], sizes = [8, 32], strides = [1, 1]} : vector<8x64xf32> to vector<8x32xf32>
    %249 = vector.extract_strided_slice %238 {offsets = [0, 64], sizes = [8, 32], strides = [1, 1]} : vector<8x96xf32> to vector<8x32xf32>
    %250 = vector.extract_strided_slice %237 {offsets = [0, 64], sizes = [8, 32], strides = [1, 1]} : vector<8x96xf32> to vector<8x32xf32>
    %251 = arith.mulf %247, %250 : vector<8x32xf32>
    %252 = arith.addf %249, %251 : vector<8x32xf32>
    %253 = math.tanh %252 : vector<8x32xf32>
    %cst_47 = arith.constant 1.000000e+00 : f32
    %254 = vector.broadcast %cst_47 : f32 to vector<8x32xf32>
    %255 = arith.subf %254, %248 : vector<8x32xf32>
    %256 = arith.mulf %255, %253 : vector<8x32xf32>
    %257 = arith.mulf %248, %214 : vector<8x32xf32>
    %258 = arith.addf %256, %257 : vector<8x32xf32>
    %259 = tpu.concatenate %258, %235 in 1 : vector<8x32xf32>, vector<8x32xf32> -> vector<8x64xf32>
    %cst_48 = arith.constant dense<0.000000e+00> : vector<8x128xf32>
    %260 = tpu.matmul %259, %10, %cst_48 {dimension_numbers = #tpu.dot_dimension_numbers<[1], [0], [0], [1], [0, 0, 1, 1], [], []>} : vector<8x64xf32>, vector<64x128xf32>, vector<8x128xf32> -> vector<8x128xf32>
    %261 = arith.addf %260, %13 : vector<8x128xf32>
    %262 = vector.extract_strided_slice %261 {offsets = [0, 0], sizes = [8, 64], strides = [1, 1]} : vector<8x128xf32> to vector<8x64xf32>
    %263 = arith.negf %262 : vector<8x64xf32>
    %264 = math.exp %263 : vector<8x64xf32>
    %cst_49 = arith.constant 1.000000e+00 : f32
    %265 = vector.broadcast %cst_49 : f32 to vector<8x64xf32>
    %266 = arith.addf %265, %264 : vector<8x64xf32>
    %267 = arith.divf %265, %266 : vector<8x64xf32>
    %268 = vector.extract_strided_slice %267 {offsets = [0, 0], sizes = [8, 32], strides = [1, 1]} : vector<8x64xf32> to vector<8x32xf32>
    %269 = vector.extract_strided_slice %267 {offsets = [0, 32], sizes = [8, 32], strides = [1, 1]} : vector<8x64xf32> to vector<8x32xf32>
    %270 = vector.extract_strided_slice %261 {offsets = [0, 64], sizes = [8, 32], strides = [1, 1]} : vector<8x128xf32> to vector<8x32xf32>
    %271 = vector.extract_strided_slice %261 {offsets = [0, 96], sizes = [8, 32], strides = [1, 1]} : vector<8x128xf32> to vector<8x32xf32>
    %272 = arith.mulf %268, %271 : vector<8x32xf32>
    %273 = arith.addf %270, %272 : vector<8x32xf32>
    %274 = math.tanh %273 : vector<8x32xf32>
    %cst_50 = arith.constant 1.000000e+00 : f32
    %275 = vector.broadcast %cst_50 : f32 to vector<8x32xf32>
    %276 = arith.subf %275, %269 : vector<8x32xf32>
    %277 = arith.mulf %276, %274 : vector<8x32xf32>
    %278 = arith.mulf %269, %235 : vector<8x32xf32>
    %279 = arith.addf %277, %278 : vector<8x32xf32>
    %cst_51 = arith.constant dense<0.000000e+00> : vector<8x96xf32>
    %280 = tpu.matmul %258, %6, %cst_51 {dimension_numbers = #tpu.dot_dimension_numbers<[1], [0], [0], [1], [0, 0, 1, 1], [], []>} : vector<8x32xf32>, vector<32x96xf32>, vector<8x96xf32> -> vector<8x96xf32>
    %281 = arith.addf %280, %9 : vector<8x96xf32>
    %282 = vector.extract_strided_slice %5 {offsets = [0, 576], sizes = [8, 96], strides = [1, 1]} : vector<8x768xf32> to vector<8x96xf32>
    %283 = vector.extract_strided_slice %282 {offsets = [0, 0], sizes = [8, 64], strides = [1, 1]} : vector<8x96xf32> to vector<8x64xf32>
    %284 = vector.extract_strided_slice %281 {offsets = [0, 0], sizes = [8, 64], strides = [1, 1]} : vector<8x96xf32> to vector<8x64xf32>
    %285 = arith.addf %283, %284 : vector<8x64xf32>
    %286 = arith.negf %285 : vector<8x64xf32>
    %287 = math.exp %286 : vector<8x64xf32>
    %cst_52 = arith.constant 1.000000e+00 : f32
    %288 = vector.broadcast %cst_52 : f32 to vector<8x64xf32>
    %289 = arith.addf %288, %287 : vector<8x64xf32>
    %290 = arith.divf %288, %289 : vector<8x64xf32>
    %291 = vector.extract_strided_slice %290 {offsets = [0, 0], sizes = [8, 32], strides = [1, 1]} : vector<8x64xf32> to vector<8x32xf32>
    %292 = vector.extract_strided_slice %290 {offsets = [0, 32], sizes = [8, 32], strides = [1, 1]} : vector<8x64xf32> to vector<8x32xf32>
    %293 = vector.extract_strided_slice %282 {offsets = [0, 64], sizes = [8, 32], strides = [1, 1]} : vector<8x96xf32> to vector<8x32xf32>
    %294 = vector.extract_strided_slice %281 {offsets = [0, 64], sizes = [8, 32], strides = [1, 1]} : vector<8x96xf32> to vector<8x32xf32>
    %295 = arith.mulf %291, %294 : vector<8x32xf32>
    %296 = arith.addf %293, %295 : vector<8x32xf32>
    %297 = math.tanh %296 : vector<8x32xf32>
    %cst_53 = arith.constant 1.000000e+00 : f32
    %298 = vector.broadcast %cst_53 : f32 to vector<8x32xf32>
    %299 = arith.subf %298, %292 : vector<8x32xf32>
    %300 = arith.mulf %299, %297 : vector<8x32xf32>
    %301 = arith.mulf %292, %258 : vector<8x32xf32>
    %302 = arith.addf %300, %301 : vector<8x32xf32>
    %303 = tpu.concatenate %302, %279 in 1 : vector<8x32xf32>, vector<8x32xf32> -> vector<8x64xf32>
    %cst_54 = arith.constant dense<0.000000e+00> : vector<8x128xf32>
    %304 = tpu.matmul %303, %10, %cst_54 {dimension_numbers = #tpu.dot_dimension_numbers<[1], [0], [0], [1], [0, 0, 1, 1], [], []>} : vector<8x64xf32>, vector<64x128xf32>, vector<8x128xf32> -> vector<8x128xf32>
    %305 = arith.addf %304, %13 : vector<8x128xf32>
    %306 = vector.extract_strided_slice %305 {offsets = [0, 0], sizes = [8, 64], strides = [1, 1]} : vector<8x128xf32> to vector<8x64xf32>
    %307 = arith.negf %306 : vector<8x64xf32>
    %308 = math.exp %307 : vector<8x64xf32>
    %cst_55 = arith.constant 1.000000e+00 : f32
    %309 = vector.broadcast %cst_55 : f32 to vector<8x64xf32>
    %310 = arith.addf %309, %308 : vector<8x64xf32>
    %311 = arith.divf %309, %310 : vector<8x64xf32>
    %312 = vector.extract_strided_slice %311 {offsets = [0, 0], sizes = [8, 32], strides = [1, 1]} : vector<8x64xf32> to vector<8x32xf32>
    %313 = vector.extract_strided_slice %311 {offsets = [0, 32], sizes = [8, 32], strides = [1, 1]} : vector<8x64xf32> to vector<8x32xf32>
    %314 = vector.extract_strided_slice %305 {offsets = [0, 64], sizes = [8, 32], strides = [1, 1]} : vector<8x128xf32> to vector<8x32xf32>
    %315 = vector.extract_strided_slice %305 {offsets = [0, 96], sizes = [8, 32], strides = [1, 1]} : vector<8x128xf32> to vector<8x32xf32>
    %316 = arith.mulf %312, %315 : vector<8x32xf32>
    %317 = arith.addf %314, %316 : vector<8x32xf32>
    %318 = math.tanh %317 : vector<8x32xf32>
    %cst_56 = arith.constant 1.000000e+00 : f32
    %319 = vector.broadcast %cst_56 : f32 to vector<8x32xf32>
    %320 = arith.subf %319, %313 : vector<8x32xf32>
    %321 = arith.mulf %320, %318 : vector<8x32xf32>
    %322 = arith.mulf %313, %279 : vector<8x32xf32>
    %323 = arith.addf %321, %322 : vector<8x32xf32>
    %cst_57 = arith.constant dense<0.000000e+00> : vector<8x96xf32>
    %324 = tpu.matmul %302, %6, %cst_57 {dimension_numbers = #tpu.dot_dimension_numbers<[1], [0], [0], [1], [0, 0, 1, 1], [], []>} : vector<8x32xf32>, vector<32x96xf32>, vector<8x96xf32> -> vector<8x96xf32>
    %325 = arith.addf %324, %9 : vector<8x96xf32>
    %326 = vector.extract_strided_slice %5 {offsets = [0, 672], sizes = [8, 96], strides = [1, 1]} : vector<8x768xf32> to vector<8x96xf32>
    %327 = vector.extract_strided_slice %326 {offsets = [0, 0], sizes = [8, 64], strides = [1, 1]} : vector<8x96xf32> to vector<8x64xf32>
    %328 = vector.extract_strided_slice %325 {offsets = [0, 0], sizes = [8, 64], strides = [1, 1]} : vector<8x96xf32> to vector<8x64xf32>
    %329 = arith.addf %327, %328 : vector<8x64xf32>
    %330 = arith.negf %329 : vector<8x64xf32>
    %331 = math.exp %330 : vector<8x64xf32>
    %cst_58 = arith.constant 1.000000e+00 : f32
    %332 = vector.broadcast %cst_58 : f32 to vector<8x64xf32>
    %333 = arith.addf %332, %331 : vector<8x64xf32>
    %334 = arith.divf %332, %333 : vector<8x64xf32>
    %335 = vector.extract_strided_slice %334 {offsets = [0, 0], sizes = [8, 32], strides = [1, 1]} : vector<8x64xf32> to vector<8x32xf32>
    %336 = vector.extract_strided_slice %334 {offsets = [0, 32], sizes = [8, 32], strides = [1, 1]} : vector<8x64xf32> to vector<8x32xf32>
    %337 = vector.extract_strided_slice %326 {offsets = [0, 64], sizes = [8, 32], strides = [1, 1]} : vector<8x96xf32> to vector<8x32xf32>
    %338 = vector.extract_strided_slice %325 {offsets = [0, 64], sizes = [8, 32], strides = [1, 1]} : vector<8x96xf32> to vector<8x32xf32>
    %339 = arith.mulf %335, %338 : vector<8x32xf32>
    %340 = arith.addf %337, %339 : vector<8x32xf32>
    %341 = math.tanh %340 : vector<8x32xf32>
    %cst_59 = arith.constant 1.000000e+00 : f32
    %342 = vector.broadcast %cst_59 : f32 to vector<8x32xf32>
    %343 = arith.subf %342, %336 : vector<8x32xf32>
    %344 = arith.mulf %343, %341 : vector<8x32xf32>
    %345 = arith.mulf %336, %302 : vector<8x32xf32>
    %346 = arith.addf %344, %345 : vector<8x32xf32>
    %347 = tpu.concatenate %346, %323 in 1 : vector<8x32xf32>, vector<8x32xf32> -> vector<8x64xf32>
    %cst_60 = arith.constant dense<0.000000e+00> : vector<8x128xf32>
    %348 = tpu.matmul %347, %10, %cst_60 {dimension_numbers = #tpu.dot_dimension_numbers<[1], [0], [0], [1], [0, 0, 1, 1], [], []>} : vector<8x64xf32>, vector<64x128xf32>, vector<8x128xf32> -> vector<8x128xf32>
    %349 = arith.addf %348, %13 : vector<8x128xf32>
    %350 = vector.extract_strided_slice %349 {offsets = [0, 0], sizes = [8, 64], strides = [1, 1]} : vector<8x128xf32> to vector<8x64xf32>
    %351 = arith.negf %350 : vector<8x64xf32>
    %352 = math.exp %351 : vector<8x64xf32>
    %cst_61 = arith.constant 1.000000e+00 : f32
    %353 = vector.broadcast %cst_61 : f32 to vector<8x64xf32>
    %354 = arith.addf %353, %352 : vector<8x64xf32>
    %355 = arith.divf %353, %354 : vector<8x64xf32>
    %356 = vector.extract_strided_slice %355 {offsets = [0, 0], sizes = [8, 32], strides = [1, 1]} : vector<8x64xf32> to vector<8x32xf32>
    %357 = vector.extract_strided_slice %355 {offsets = [0, 32], sizes = [8, 32], strides = [1, 1]} : vector<8x64xf32> to vector<8x32xf32>
    %358 = vector.extract_strided_slice %349 {offsets = [0, 64], sizes = [8, 32], strides = [1, 1]} : vector<8x128xf32> to vector<8x32xf32>
    %359 = vector.extract_strided_slice %349 {offsets = [0, 96], sizes = [8, 32], strides = [1, 1]} : vector<8x128xf32> to vector<8x32xf32>
    %360 = arith.mulf %356, %359 : vector<8x32xf32>
    %361 = arith.addf %358, %360 : vector<8x32xf32>
    %362 = math.tanh %361 : vector<8x32xf32>
    %cst_62 = arith.constant 1.000000e+00 : f32
    %363 = vector.broadcast %cst_62 : f32 to vector<8x32xf32>
    %364 = arith.subf %363, %357 : vector<8x32xf32>
    %365 = arith.mulf %364, %362 : vector<8x32xf32>
    %366 = arith.mulf %357, %323 : vector<8x32xf32>
    %367 = arith.addf %365, %366 : vector<8x32xf32>
    %368 = tpu.concatenate %59, %103, %147, %191, %235, %279, %323, %367 in 1 : vector<8x32xf32>, vector<8x32xf32>, vector<8x32xf32>, vector<8x32xf32>, vector<8x32xf32>, vector<8x32xf32>, vector<8x32xf32>, vector<8x32xf32> -> vector<8x256xf32>
    %c0_63 = arith.constant 0 : index
    %c0_64 = arith.constant 0 : index
    %369 = vector.load %arg7[%c0_63, %c0_64] : memref<256x64xf32, #tpu.memory_space<vmem>>, vector<256x64xf32>
    %cst_65 = arith.constant dense<0.000000e+00> : vector<8x64xf32>
    %370 = tpu.matmul %368, %369, %cst_65 {dimension_numbers = #tpu.dot_dimension_numbers<[1], [0], [0], [1], [0, 0, 1, 1], [], []>} : vector<8x256xf32>, vector<256x64xf32>, vector<8x64xf32> -> vector<8x64xf32>
    %c0_66 = arith.constant 0 : index
    %c0_67 = arith.constant 0 : index
    %371 = vector.load %arg8[%c0_66, %c0_67] : memref<1x64xf32, #tpu.memory_space<vmem>>, vector<1x64xf32>
    %372 = vector.broadcast %371 : vector<1x64xf32> to vector<8x64xf32>
    %373 = arith.addf %370, %372 : vector<8x64xf32>
    %c0_68 = arith.constant 0 : index
    %c0_69 = arith.constant 0 : index
    %374 = vector.load %arg9[%c0_68, %c0_69] : memref<8x64xf32, #tpu.memory_space<vmem>>, vector<8x64xf32>
    tpu.vector_store %arg9[%c0_68, %c0_69], %373 {strides = array<i32>} : memref<8x64xf32, #tpu.memory_space<vmem>>, vector<8x64xf32>,
    return
  }
}

</mosaic_0001>

<llo_original>
// kernel: filmgen_forward.1
$region0: #{filmgen_forward.1}
  #allocation0 [shape = 'u32[]', space=smem, size = 0x4, offset = 0x4, fixed_abs, tag = 'smem constant byte address 0x4 - core index']
  #allocation1 [shape = 'u32[144,128]{1,0:T(1,128)}', space=vmem, size = 0x12000, scoped, tag = 'internal scratch']
  %s0 = inlined_call_operand.vmem [shape: f32[8,128], index: 0, kind: input, shape index: {}]
  %s1 = inlined_call_operand.hbm [shape: f32[128,768], index: 1, kind: input, shape index: {}]
  %s2 = inlined_call_operand.vmem [shape: f32[1,768], index: 2, kind: input, shape index: {}]
  %s3 = inlined_call_operand.vmem [shape: f32[32,96], index: 3, kind: input, shape index: {}]
  %s4 = inlined_call_operand.vmem [shape: f32[1,96], index: 4, kind: input, shape index: {}]
  %s5 = inlined_call_operand.vmem [shape: f32[64,128], index: 5, kind: input, shape index: {}]
  %s6 = inlined_call_operand.vmem [shape: f32[1,128], index: 6, kind: input, shape index: {}]
  %s7 = inlined_call_operand.vmem [shape: f32[256,64], index: 7, kind: input, shape index: {}]
  %s8 = inlined_call_operand.vmem [shape: f32[1,64], index: 8, kind: input, shape index: {}]
  %s9 = inlined_call_operand.vmem [shape: f32[8,64], index: 9, kind: output, shape index: {}]
  %s10 = sld [smem:[#allocation0]]
  $region50: #{filmgen_forward.1} parent=0
    _
  %s12 = ssub.s32 1, %s10
  %s13 = scalar_select 0, %s12, %s10
  $region1: #{filmgen_forward.1} parent=0
    #allocation2 [shape = 'u8[393216]{0}', space=vmem, size = 0x60000, scoped, tag = 'input window, operand 1, single buffered']
    #allocation3 [shape = 's32[1]{0}', space=sflag, size = 0x4, scoped, tag = 'scoped memory for filmgen_forward.1']
    %14 = vsyncpa [#allocation3], 0
    // Predicated region
    $region2: #{filmgen_forward.1} parent=1 // pred_check
      _
    $region3: #{filmgen_forward.1} parent=1 // pred_check_branch
      %16 = sbr.rel (0) target = $region5
    $region4: #{filmgen_forward.1} parent=1 // pred_region
      _
    $region5: #{filmgen_forward.1} parent=1 // pred_fallthru
      _
    // Predicated region
    $region6: #{filmgen_forward.1} parent=1 // pred_check
      _
    $region7: #{filmgen_forward.1} parent=1 // pred_check_branch
      %18 = sbr.rel (0) target = $region9
    $region8: #{filmgen_forward.1} parent=1 // pred_region
      %s20 = ssub.s32 12288, 12288
      %21 = vsyncadd [#allocation3], %s20
      %s22 = sshll.u32 [#allocation2], 4
      %s23 = int_to_ptr.vmem [resolvable:$true] %s22
      %28 = dma.hbm_to_vmem [thread:$0]  %s1, 12288, %s23, [#allocation3], 768, 768, 48
    $region9: #{filmgen_forward.1} parent=1 // pred_fallthru
      _
    // Predicated region
    $region10: #{filmgen_forward.1} parent=1 // pred_check
      _
    $region11: #{filmgen_forward.1} parent=1 // pred_check_branch
      %30 = sbr.rel (0) target = $region13
    $region12: #{filmgen_forward.1} parent=1 // pred_region
      _
    $region13: #{filmgen_forward.1} parent=1 // pred_fallthru
      _
    // Predicated region
    $region14: #{filmgen_forward.1} parent=1 // pred_check
      _
    $region15: #{filmgen_forward.1} parent=1 // pred_check_branch
      %32 = sbr.rel (0) target = $region17
    $region16: #{filmgen_forward.1} parent=1 // pred_region
      _
    $region17: #{filmgen_forward.1} parent=1 // pred_fallthru
      _
    // Predicated region
    $region18: #{filmgen_forward.1} parent=1 // pred_check
      _
    $region19: #{filmgen_forward.1} parent=1 // pred_check_branch
      %34 = sbr.rel (0) target = $region21
    $region20: #{filmgen_forward.1} parent=1 // pred_region
      _
    $region21: #{filmgen_forward.1} parent=1 // pred_fallthru
      _
    // Predicated region
    $region22: #{filmgen_forward.1} parent=1 // pred_check
      _
    $region23: #{filmgen_forward.1} parent=1 // pred_check_branch
      %36 = sbr.rel (0) target = $region25
    $region24: #{filmgen_forward.1} parent=1 // pred_region
      _
    $region25: #{filmgen_forward.1} parent=1 // pred_fallthru
      _
    // Predicated region
    $region26: #{filmgen_forward.1} parent=1 // pred_check
      _
    $region27: #{filmgen_forward.1} parent=1 // pred_check_branch
      %38 = sbr.rel (0) target = $region29
    $region28: #{filmgen_forward.1} parent=1 // pred_region
      _
    $region29: #{filmgen_forward.1} parent=1 // pred_fallthru
      _
    // Predicated region
    $region30: #{filmgen_forward.1} parent=1 // pred_check
      _
    $region31: #{filmgen_forward.1} parent=1 // pred_check_branch
      %40 = sbr.rel (0) target = $region33
    $region32: #{filmgen_forward.1} parent=1 // pred_region
      _
    $region33: #{filmgen_forward.1} parent=1 // pred_fallthru
      _
    // Predicated region
    $region34: #{filmgen_forward.1} parent=1 // pred_check
      _
    $region35: #{filmgen_forward.1} parent=1 // pred_check_branch
      %42 = sbr.rel (0) target = $region37
    $region36: #{filmgen_forward.1} parent=1 // pred_region
      _
    $region37: #{filmgen_forward.1} parent=1 // pred_fallthru
      _
    // Predicated region
    $region38: #{filmgen_forward.1} parent=1 // pred_check
      _
    $region39: #{filmgen_forward.1} parent=1 // pred_check_branch
      %44 = sbr.rel (0) target = $region41
    $region40: #{filmgen_forward.1} parent=1 // pred_region
      %45 = dma.done [#allocation3], 12288
    $region41: #{filmgen_forward.1} parent=1 // pred_fallthru
      _
    %v46 = vld [vmem:[%s0] sm:$0xff]
    %v47 = vld [vmem:[#allocation2] sm:$0xff]
    %v48 = vld [vmem:[#allocation2 + $0x8] sm:$0xff]
    %v49 = vld [vmem:[#allocation2 + $0x10] sm:$0xff]
    %v50 = vld [vmem:[#allocation2 + $0x18] sm:$0xff]
    %v51 = vld [vmem:[#allocation2 + $0x20] sm:$0xff]
    %v52 = vld [vmem:[#allocation2 + $0x28] sm:$0xff]
    %v53 = vld [vmem:[#allocation2 + $0x30] sm:$0xff]
    %v54 = vld [vmem:[#allocation2 + $0x38] sm:$0xff]
    %v55 = vld [vmem:[#allocation2 + $0x40] sm:$0xff]
    %v56 = vld [vmem:[#allocation2 + $0x48] sm:$0xff]
    %v57 = vld [vmem:[#allocation2 + $0x50] sm:$0xff]
    %v58 = vld [vmem:[#allocation2 + $0x58] sm:$0xff]
    %v59 = vld [vmem:[#allocation2 + $0x60] sm:$0xff]
    %v60 = vld [vmem:[#allocation2 + $0x68] sm:$0xff]
    %v61 = vld [vmem:[#allocation2 + $0x70] sm:$0xff]
    %v62 = vld [vmem:[#allocation2 + $0x78] sm:$0xff]
    %v63 = vld [vmem:[#allocation2 + $0x80] sm:$0xff]
    %v64 = vld [vmem:[#allocation2 + $0x88] sm:$0xff]
    %v65 = vld [vmem:[#allocation2 + $0x90] sm:$0xff]
    %v66 = vld [vmem:[#allocation2 + $0x98] sm:$0xff]
    %v67 = vld [vmem:[#allocation2 + $0xa0] sm:$0xff]
    %v68 = vld [vmem:[#allocation2 + $0xa8] sm:$0xff]
    %v69 = vld [vmem:[#allocation2 + $0xb0] sm:$0xff]
    %v70 = vld [vmem:[#allocation2 + $0xb8] sm:$0xff]
    %v71 = vld [vmem:[#allocation2 + $0xc0] sm:$0xff]
    %v72 = vld [vmem:[#allocation2 + $0xc8] sm:$0xff]
    %v73 = vld [vmem:[#allocation2 + $0xd0] sm:$0xff]
    %v74 = vld [vmem:[#allocation2 + $0xd8] sm:$0xff]
    %v75 = vld [vmem:[#allocation2 + $0xe0] sm:$0xff]
    %v76 = vld [vmem:[#allocation2 + $0xe8] sm:$0xff]
    %v77 = vld [vmem:[#allocation2 + $0xf0] sm:$0xff]
    %v78 = vld [vmem:[#allocation2 + $0xf8] sm:$0xff]
    %v79 = vld [vmem:[#allocation2 + $0x100] sm:$0xff]
    %v80 = vld [vmem:[#allocation2 + $0x108] sm:$0xff]
    %v81 = vld [vmem:[#allocation2 + $0x110] sm:$0xff]
    %v82 = vld [vmem:[#allocation2 + $0x118] sm:$0xff]
    %v83 = vld [vmem:[#allocation2 + $0x120] sm:$0xff]
    %v84 = vld [vmem:[#allocation2 + $0x128] sm:$0xff]
    %v85 = vld [vmem:[#allocation2 + $0x130] sm:$0xff]
    %v86 = vld [vmem:[#allocation2 + $0x138] sm:$0xff]
    %v87 = vld [vmem:[#allocation2 + $0x140] sm:$0xff]
    %v88 = vld [vmem:[#allocation2 + $0x148] sm:$0xff]
    %v89 = vld [vmem:[#allocation2 + $0x150] sm:$0xff]
    %v90 = vld [vmem:[#allocation2 + $0x158] sm:$0xff]
    %v91 = vld [vmem:[#allocation2 + $0x160] sm:$0xff]
    %v92 = vld [vmem:[#allocation2 + $0x168] sm:$0xff]
    %v93 = vld [vmem:[#allocation2 + $0x170] sm:$0xff]
    %v94 = vld [vmem:[#allocation2 + $0x178] sm:$0xff]
    %v95 = vld [vmem:[#allocation2 + $0x180] sm:$0xff]
    %v96 = vld [vmem:[#allocation2 + $0x188] sm:$0xff]
    %v97 = vld [vmem:[#allocation2 + $0x190] sm:$0xff]
    %v98 = vld [vmem:[#allocation2 + $0x198] sm:$0xff]
    %v99 = vld [vmem:[#allocation2 + $0x1a0] sm:$0xff]
    %v100 = vld [vmem:[#allocation2 + $0x1a8] sm:$0xff]
    %v101 = vld [vmem:[#allocation2 + $0x1b0] sm:$0xff]
    %v102 = vld [vmem:[#allocation2 + $0x1b8] sm:$0xff]
    %v103 = vld [vmem:[#allocation2 + $0x1c0] sm:$0xff]
    %v104 = vld [vmem:[#allocation2 + $0x1c8] sm:$0xff]
    %v105 = vld [vmem:[#allocation2 + $0x1d0] sm:$0xff]
    %v106 = vld [vmem:[#allocation2 + $0x1d8] sm:$0xff]
    %v107 = vld [vmem:[#allocation2 + $0x1e0] sm:$0xff]
    %v108 = vld [vmem:[#allocation2 + $0x1e8] sm:$0xff]
    %v109 = vld [vmem:[#allocation2 + $0x1f0] sm:$0xff]
    %v110 = vld [vmem:[#allocation2 + $0x1f8] sm:$0xff]
    %v111 = vld [vmem:[#allocation2 + $0x200] sm:$0xff]
    %v112 = vld [vmem:[#allocation2 + $0x208] sm:$0xff]
    %v113 = vld [vmem:[#allocation2 + $0x210] sm:$0xff]
    %v114 = vld [vmem:[#allocation2 + $0x218] sm:$0xff]
    %v115 = vld [vmem:[#allocation2 + $0x220] sm:$0xff]
    %v116 = vld [vmem:[#allocation2 + $0x228] sm:$0xff]
    %v117 = vld [vmem:[#allocation2 + $0x230] sm:$0xff]
    %v118 = vld [vmem:[#allocation2 + $0x238] sm:$0xff]
    %v119 = vld [vmem:[#allocation2 + $0x240] sm:$0xff]
    %v120 = vld [vmem:[#allocation2 + $0x248] sm:$0xff]
    %v121 = vld [vmem:[#allocation2 + $0x250] sm:$0xff]
    %v122 = vld [vmem:[#allocation2 + $0x258] sm:$0xff]
    %v123 = vld [vmem:[#allocation2 + $0x260] sm:$0xff]
    %v124 = vld [vmem:[#allocation2 + $0x268] sm:$0xff]
    %v125 = vld [vmem:[#allocation2 + $0x270] sm:$0xff]
    %v126 = vld [vmem:[#allocation2 + $0x278] sm:$0xff]
    %v127 = vld [vmem:[#allocation2 + $0x280] sm:$0xff]
    %v128 = vld [vmem:[#allocation2 + $0x288] sm:$0xff]
    %v129 = vld [vmem:[#allocation2 + $0x290] sm:$0xff]
    %v130 = vld [vmem:[#allocation2 + $0x298] sm:$0xff]
    %v131 = vld [vmem:[#allocation2 + $0x2a0] sm:$0xff]
    %v132 = vld [vmem:[#allocation2 + $0x2a8] sm:$0xff]
    %v133 = vld [vmem:[#allocation2 + $0x2b0] sm:$0xff]
    %v134 = vld [vmem:[#allocation2 + $0x2b8] sm:$0xff]
    %v135 = vld [vmem:[#allocation2 + $0x2c0] sm:$0xff]
    %v136 = vld [vmem:[#allocation2 + $0x2c8] sm:$0xff]
    %v137 = vld [vmem:[#allocation2 + $0x2d0] sm:$0xff]
    %v138 = vld [vmem:[#allocation2 + $0x2d8] sm:$0xff]
    %v139 = vld [vmem:[#allocation2 + $0x2e0] sm:$0xff]
    %v140 = vld [vmem:[#allocation2 + $0x2e8] sm:$0xff]
    %v141 = vld [vmem:[#allocation2 + $0x2f0] sm:$0xff]
    %v142 = vld [vmem:[#allocation2 + $0x2f8] sm:$0xff]
    %v143 = vld [vmem:[%s2] sm:$0x3f]
    %v145 = vlaneseq
    %v146 = vshrl.u32 %v145, 7
    %v147 = vsub.s32 0, %v146
    %v148 = vrot.slane %v143, %v147
    %v149 = vlaneseq
    %v150 = vshrl.u32 %v149, 7
    %v151 = vsub.s32 1, %v150
    %v152 = vrot.slane %v143, %v151
    %v153 = vlaneseq
    %v154 = vshrl.u32 %v153, 7
    %v155 = vsub.s32 2, %v154
    %v156 = vrot.slane %v143, %v155
    %v157 = vlaneseq
    %v158 = vshrl.u32 %v157, 7
    %v159 = vsub.s32 3, %v158
    %v160 = vrot.slane %v143, %v159
    %v161 = vlaneseq
    %v162 = vshrl.u32 %v161, 7
    %v163 = vsub.s32 4, %v162
    %v164 = vrot.slane %v143, %v163
    %v165 = vlaneseq
    %v166 = vshrl.u32 %v165, 7
    %v167 = vsub.s32 5, %v166
    %v168 = vrot.slane %v143, %v167
    %175 = vmatprep.subr.mxu0 %v48
    %176 = vmatpush1.msra.mxu0 %v47
    %177 = vmatprep.subr.mxu0 %v54
    %178 = vmatpush1.msra.mxu0 %v53
    %179 = vmatprep.subr.mxu0 %v60
    %180 = vmatpush1.msra.mxu0 %v59
    %181 = vmatprep.subr.mxu0 %v66
    %182 = vmatpush1.msra.mxu0 %v65
    %183 = vmatprep.subr.mxu0 %v72
    %184 = vmatpush1.msra.mxu0 %v71
    %185 = vmatprep.subr.mxu0 %v78
    %186 = vmatpush1.msra.mxu0 %v77
    %187 = vmatprep.subr.mxu0 %v84
    %188 = vmatpush1.msra.mxu0 %v83
    %189 = vmatprep.subr.mxu0 %v90
    %190 = vmatpush1.msra.mxu0 %v89
    %191 = vmatprep.subr.mxu0 %v96
    %192 = vmatpush1.msra.mxu0 %v95
    %193 = vmatprep.subr.mxu0 %v102
    %194 = vmatpush1.msra.mxu0 %v101
    %195 = vmatprep.subr.mxu0 %v108
    %196 = vmatpush1.msra.mxu0 %v107
    %197 = vmatprep.subr.mxu0 %v114
    %198 = vmatpush1.msra.mxu0 %v113
    %199 = vmatprep.subr.mxu0 %v120
    %200 = vmatpush1.msra.mxu0 %v119
    %201 = vmatprep.subr.mxu0 %v126
    %202 = vmatpush1.msra.mxu0 %v125
    %203 = vmatprep.subr.mxu0 %v132
    %204 = vmatpush1.msra.mxu0 %v131
    %205 = vmatprep.subr.mxu0 %v138
    %206 = vmatpush1.msra.mxu0 %v137
    %207 = vmatprep.subr.mxu0 0.0
    %208 = vmatpush1.msra.mxu0 0.0
    %209 = vmatprep.subr.mxu0 0.0
    %210 = vmatpush1.msra.mxu0 0.0
    %211 = vmatprep.subr.mxu0 0.0
    %212 = vmatpush1.msra.mxu0 0.0
    %213 = vmatprep.subr.mxu0 0.0
    %214 = vmatpush1.msra.mxu0 0.0
    %215 = vmatprep.subr.mxu0 0.0
    %216 = vmatpush1.msra.mxu0 0.0
    %217 = vmatprep.subr.mxu0 0.0
    %218 = vmatpush1.msra.mxu0 0.0
    %219 = vmatprep.subr.mxu0 0.0
    %220 = vmatpush1.msra.mxu0 0.0
    %221 = vmatprep.subr.mxu0 0.0
    %222 = vmatpush1.msra.mxu0 0.0
    %223 = vmatprep.subr.mxu0 0.0
    %224 = vmatpush1.msra.mxu0 0.0
    %225 = vmatprep.subr.mxu0 0.0
    %226 = vmatpush1.msra.mxu0 0.0
    %227 = vmatprep.subr.mxu0 0.0
    %228 = vmatpush1.msra.mxu0 0.0
    %229 = vmatprep.subr.mxu0 0.0
    %230 = vmatpush1.msra.mxu0 0.0
    %231 = vmatprep.subr.mxu0 0.0
    %232 = vmatpush1.msra.mxu0 0.0
    %233 = vmatprep.subr.mxu0 0.0
    %234 = vmatpush1.msra.mxu0 0.0
    %235 = vmatprep.subr.mxu0 0.0
    %236 = vmatpush1.msra.mxu0 0.0
    %237 = vmatprep.subr.mxu0 0.0
    %238 = vmatpush1.msra.mxu0 0.0
    %239 = vmatprep.mubr.f32.mxu0 0.0
    %240 = vmatmul.mubr.f32.gmra.mrb[0].mxu0 %v46
    %v241 = vpop.f32.mrb[0].mxu0
    %v242 = vadd.f32 %v148, %v241
    %v243 = vpop.f32.mrb[0].mxu0
    %v244 = vadd.f32 %v152, %v243
    %245 = vdwg.mxu0
    %246 = vmatprep.subr.mxu0 %v50
    %247 = vmatpush1.msra.mxu0 %v49
    %248 = vmatprep.subr.mxu0 %v56
    %249 = vmatpush1.msra.mxu0 %v55
    %250 = vmatprep.subr.mxu0 %v62
    %251 = vmatpush1.msra.mxu0 %v61
    %252 = vmatprep.subr.mxu0 %v68
    %253 = vmatpush1.msra.mxu0 %v67
    %254 = vmatprep.subr.mxu0 %v74
    %255 = vmatpush1.msra.mxu0 %v73
    %256 = vmatprep.subr.mxu0 %v80
    %257 = vmatpush1.msra.mxu0 %v79
    %258 = vmatprep.subr.mxu0 %v86
    %259 = vmatpush1.msra.mxu0 %v85
    %260 = vmatprep.subr.mxu0 %v92
    %261 = vmatpush1.msra.mxu0 %v91
    %262 = vmatprep.subr.mxu0 %v98
    %263 = vmatpush1.msra.mxu0 %v97
    %264 = vmatprep.subr.mxu0 %v104
    %265 = vmatpush1.msra.mxu0 %v103
    %266 = vmatprep.subr.mxu0 %v110
    %267 = vmatpush1.msra.mxu0 %v109
    %268 = vmatprep.subr.mxu0 %v116
    %269 = vmatpush1.msra.mxu0 %v115
    %270 = vmatprep.subr.mxu0 %v122
    %271 = vmatpush1.msra.mxu0 %v121
    %272 = vmatprep.subr.mxu0 %v128
    %273 = vmatpush1.msra.mxu0 %v127
    %274 = vmatprep.subr.mxu0 %v134
    %275 = vmatpush1.msra.mxu0 %v133
    %276 = vmatprep.subr.mxu0 %v140
    %277 = vmatpush1.msra.mxu0 %v139
    %278 = vmatprep.subr.mxu0 0.0
    %279 = vmatpush1.msra.mxu0 0.0
    %280 = vmatprep.subr.mxu0 0.0
    %281 = vmatpush1.msra.mxu0 0.0
    %282 = vmatprep.subr.mxu0 0.0
    %283 = vmatpush1.msra.mxu0 0.0
    %284 = vmatprep.subr.mxu0 0.0
    %285 = vmatpush1.msra.mxu0 0.0
    %286 = vmatprep.subr.mxu0 0.0
    %287 = vmatpush1.msra.mxu0 0.0
    %288 = vmatprep.subr.mxu0 0.0
    %289 = vmatpush1.msra.mxu0 0.0
    %290 = vmatprep.subr.mxu0 0.0
    %291 = vmatpush1.msra.mxu0 0.0
    %292 = vmatprep.subr.mxu0 0.0
    %293 = vmatpush1.msra.mxu0 0.0
    %294 = vmatprep.subr.mxu0 0.0
    %295 = vmatpush1.msra.mxu0 0.0
    %296 = vmatprep.subr.mxu0 0.0
    %297 = vmatpush1.msra.mxu0 0.0
    %298 = vmatprep.subr.mxu0 0.0
    %299 = vmatpush1.msra.mxu0 0.0
    %300 = vmatprep.subr.mxu0 0.0
    %301 = vmatpush1.msra.mxu0 0.0
    %302 = vmatprep.subr.mxu0 0.0
    %303 = vmatpush1.msra.mxu0 0.0
    %304 = vmatprep.subr.mxu0 0.0
    %305 = vmatpush1.msra.mxu0 0.0
    %306 = vmatprep.subr.mxu0 0.0
    %307 = vmatpush1.msra.mxu0 0.0
    %308 = vmatprep.subr.mxu0 0.0
    %309 = vmatpush1.msra.mxu0 0.0
    %310 = vmatprep.mubr.f32.mxu0 0.0
    %311 = vmatmul.mubr.f32.gmra.mrb[0].mxu0 %v46
    %v312 = vpop.f32.mrb[0].mxu0
    %v313 = vadd.f32 %v156, %v312
    %v314 = vpop.f32.mrb[0].mxu0
    %v315 = vadd.f32 %v160, %v314
    %316 = vdwg.mxu0
    %317 = vmatprep.subr.mxu0 %v52
    %318 = vmatpush1.msra.mxu0 %v51
    %319 = vmatprep.subr.mxu0 %v58
    %320 = vmatpush1.msra.mxu0 %v57
    %321 = vmatprep.subr.mxu0 %v64
    %322 = vmatpush1.msra.mxu0 %v63
    %323 = vmatprep.subr.mxu0 %v70
    %324 = vmatpush1.msra.mxu0 %v69
    %325 = vmatprep.subr.mxu0 %v76
    %326 = vmatpush1.msra.mxu0 %v75
    %327 = vmatprep.subr.mxu0 %v82
    %328 = vmatpush1.msra.mxu0 %v81
    %329 = vmatprep.subr.mxu0 %v88
    %330 = vmatpush1.msra.mxu0 %v87
    %331 = vmatprep.subr.mxu0 %v94
    %332 = vmatpush1.msra.mxu0 %v93
    %333 = vmatprep.subr.mxu0 %v100
    %334 = vmatpush1.msra.mxu0 %v99
    %335 = vmatprep.subr.mxu0 %v106
    %336 = vmatpush1.msra.mxu0 %v105
    %337 = vmatprep.subr.mxu0 %v112
    %338 = vmatpush1.msra.mxu0 %v111
    %339 = vmatprep.subr.mxu0 %v118
    %340 = vmatpush1.msra.mxu0 %v117
    %341 = vmatprep.subr.mxu0 %v124
    %342 = vmatpush1.msra.mxu0 %v123
    %343 = vmatprep.subr.mxu0 %v130
    %344 = vmatpush1.msra.mxu0 %v129
    %345 = vmatprep.subr.mxu0 %v136
    %346 = vmatpush1.msra.mxu0 %v135
    %347 = vmatprep.subr.mxu0 %v142
    %348 = vmatpush1.msra.mxu0 %v141
    %349 = vmatprep.subr.mxu0 0.0
    %350 = vmatpush1.msra.mxu0 0.0
    %351 = vmatprep.subr.mxu0 0.0
    %352 = vmatpush1.msra.mxu0 0.0
    %353 = vmatprep.subr.mxu0 0.0
    %354 = vmatpush1.msra.mxu0 0.0
    %355 = vmatprep.subr.mxu0 0.0
    %356 = vmatpush1.msra.mxu0 0.0
    %357 = vmatprep.subr.mxu0 0.0
    %358 = vmatpush1.msra.mxu0 0.0
    %359 = vmatprep.subr.mxu0 0.0
    %360 = vmatpush1.msra.mxu0 0.0
    %361 = vmatprep.subr.mxu0 0.0
    %362 = vmatpush1.msra.mxu0 0.0
    %363 = vmatprep.subr.mxu0 0.0
    %364 = vmatpush1.msra.mxu0 0.0
    %365 = vmatprep.subr.mxu0 0.0
    %366 = vmatpush1.msra.mxu0 0.0
    %367 = vmatprep.subr.mxu0 0.0
    %368 = vmatpush1.msra.mxu0 0.0
    %369 = vmatprep.subr.mxu0 0.0
    %370 = vmatpush1.msra.mxu0 0.0
    %371 = vmatprep.subr.mxu0 0.0
    %372 = vmatpush1.msra.mxu0 0.0
    %373 = vmatprep.subr.mxu0 0.0
    %374 = vmatpush1.msra.mxu0 0.0
    %375 = vmatprep.subr.mxu0 0.0
    %376 = vmatpush1.msra.mxu0 0.0
    %377 = vmatprep.subr.mxu0 0.0
    %378 = vmatpush1.msra.mxu0 0.0
    %379 = vmatprep.subr.mxu0 0.0
    %380 = vmatpush1.msra.mxu0 0.0
    %381 = vmatprep.mubr.f32.mxu0 0.0
    %382 = vmatmul.mubr.f32.gmra.mrb[0].mxu0 %v46
    %v383 = vpop.f32.mrb[0].mxu0
    %v384 = vadd.f32 %v164, %v383
    %v385 = vpop.f32.mrb[0].mxu0
    %v386 = vadd.f32 %v168, %v385
    %387 = vdwg.mxu0
    %v388 = vld [vmem:[%s3] sm:$0xff]
    %v389 = vld [vmem:[%s3 + $0x8] sm:$0xff]
    %v390 = vld [vmem:[%s3 + $0x10] sm:$0xff]
    %v391 = vld [vmem:[%s3 + $0x18] sm:$0xff]
    %v392 = vld [vmem:[%s4] sm:$0x1]
    %v394 = vlaneseq
    %v395 = vshrl.u32 %v394, 7
    %v396 = vsub.s32 0, %v395
    %v397 = vrot.slane %v392, %v396
    %v399 = vld [vmem:[%s5] sm:$0xff]
    %v400 = vld [vmem:[%s5 + $0x8] sm:$0xff]
    %v401 = vld [vmem:[%s5 + $0x10] sm:$0xff]
    %v402 = vld [vmem:[%s5 + $0x18] sm:$0xff]
    %v403 = vld [vmem:[%s5 + $0x20] sm:$0xff]
    %v404 = vld [vmem:[%s5 + $0x28] sm:$0xff]
    %v405 = vld [vmem:[%s5 + $0x30] sm:$0xff]
    %v406 = vld [vmem:[%s5 + $0x38] sm:$0xff]
    %v407 = vld [vmem:[%s6] sm:$0x1]
    %v409 = vlaneseq
    %v410 = vshrl.u32 %v409, 7
    %v411 = vsub.s32 0, %v410
    %v412 = vrot.slane %v407, %v411
    %vm414 = vcmask 261120
    %v416 = vsel %vm414, 0.0, 0
    %418 = vmatprep.subr.mxu0 0.0
    %419 = vmatpush1.msra.mxu0 %v388
    %420 = vmatprep.subr.mxu0 0.0
    %421 = vmatpush1.msra.mxu0 %v389
    %422 = vmatprep.subr.mxu0 0.0
    %423 = vmatpush1.msra.mxu0 %v390
    %424 = vmatprep.subr.mxu0 0.0
    %425 = vmatpush1.msra.mxu0 %v391
    %426 = vmatprep.subr.mxu0 0.0
    %427 = vmatpush1.msra.mxu0 0.0
    %428 = vmatprep.subr.mxu0 0.0
    %429 = vmatpush1.msra.mxu0 0.0
    %430 = vmatprep.subr.mxu0 0.0
    %431 = vmatpush1.msra.mxu0 0.0
    %432 = vmatprep.subr.mxu0 0.0
    %433 = vmatpush1.msra.mxu0 0.0
    %434 = vmatprep.subr.mxu0 0.0
    %435 = vmatpush1.msra.mxu0 0.0
    %436 = vmatprep.subr.mxu0 0.0
    %437 = vmatpush1.msra.mxu0 0.0
    %438 = vmatprep.subr.mxu0 0.0
    %439 = vmatpush1.msra.mxu0 0.0
    %440 = vmatprep.subr.mxu0 0.0
    %441 = vmatpush1.msra.mxu0 0.0
    %442 = vmatprep.subr.mxu0 0.0
    %443 = vmatpush1.msra.mxu0 0.0
    %444 = vmatprep.subr.mxu0 0.0
    %445 = vmatpush1.msra.mxu0 0.0
    %446 = vmatprep.subr.mxu0 0.0
    %447 = vmatpush1.msra.mxu0 0.0
    %448 = vmatprep.subr.mxu0 0.0
    %449 = vmatpush1.msra.mxu0 0.0
    %450 = vmatprep.subr.mxu0 0.0
    %451 = vmatpush1.msra.mxu0 0.0
    %452 = vmatprep.subr.mxu0 0.0
    %453 = vmatpush1.msra.mxu0 0.0
    %454 = vmatprep.subr.mxu0 0.0
    %455 = vmatpush1.msra.mxu0 0.0
    %456 = vmatprep.subr.mxu0 0.0
    %457 = vmatpush1.msra.mxu0 0.0
    %458 = vmatprep.subr.mxu0 0.0
    %459 = vmatpush1.msra.mxu0 0.0
    %460 = vmatprep.subr.mxu0 0.0
    %461 = vmatpush1.msra.mxu0 0.0
    %462 = vmatprep.subr.mxu0 0.0
    %463 = vmatpush1.msra.mxu0 0.0
    %464 = vmatprep.subr.mxu0 0.0
    %465 = vmatpush1.msra.mxu0 0.0
    %466 = vmatprep.subr.mxu0 0.0
    %467 = vmatpush1.msra.mxu0 0.0
    %468 = vmatprep.subr.mxu0 0.0
    %469 = vmatpush1.msra.mxu0 0.0
    %470 = vmatprep.subr.mxu0 0.0
    %471 = vmatpush1.msra.mxu0 0.0
    %472 = vmatprep.subr.mxu0 0.0
    %473 = vmatpush1.msra.mxu0 0.0
    %474 = vmatprep.subr.mxu0 0.0
    %475 = vmatpush1.msra.mxu0 0.0
    %476 = vmatprep.subr.mxu0 0.0
    %477 = vmatpush1.msra.mxu0 0.0
    %478 = vmatprep.subr.mxu0 0.0
    %479 = vmatpush1.msra.mxu0 0.0
    %480 = vmatprep.subr.mxu0 0.0
    %481 = vmatpush1.msra.mxu0 0.0
    %482 = vmatprep.mubr.f32.mxu0 0.0
    %483 = vmatmul.mubr.f32.gmra.mrb[0].mxu0 %v416
    %v484 = vpop.f32.mrb[0].mxu0
    %v485 = vadd.f32 %v397, %v484
    %v486 = vpop.f32.mrb[0].mxu0
    %487 = vdwg.mxu0
    %v488 = vadd.f32 %v242, %v485
    %v489 = vxor.u32 %v488, 2147483648
    %v490 = vmul.f32 %v489, 1.442695
    %v491 = vpow.pop %v490
    %v492 = vadd.f32 %v491, 1.0
    %v493 = vrcp.pop %v492
    %v494 = vmul.f32 1.0, %v493
    %496 = vrot.lane.b32.xlu0 %v485, 64
    %v497 = vpop.permute.xlu0 %496
    %v499 = vmul.f32 %v494, %v497
    %501 = vrot.lane.b32.xlu0 %v499, 64
    %v502 = vpop.permute.xlu0 %501
    %v504 = vadd.f32 %v242, %v502
    %v505 = vtanh.pop %v504
    %v506 = vsub.f32 1.0, %v494
    %508 = vrot.lane.b32.xlu0 %v505, 96
    %v509 = vpop.permute.xlu0 %508
    %v511 = vmul.f32 %v506, %v509
    %v512 = vmul.f32 %v494, 0.0
    %v513 = vadd.f32 %v511, %v512
    %515 = vrot.lane.b32.xlu0 %v513, 96
    %v516 = vpop.permute.xlu0 %515
    %v518 = vsel %vm414, %v516, 0.0
    %vm519 = vcmask 523264
    %v521 = vsel %vm519, %v518, 0
    %523 = vmatprep.subr.mxu0 0.0
    %524 = vmatpush1.msra.mxu0 %v399
    %525 = vmatprep.subr.mxu0 0.0
    %526 = vmatpush1.msra.mxu0 %v400
    %527 = vmatprep.subr.mxu0 0.0
    %528 = vmatpush1.msra.mxu0 %v401
    %529 = vmatprep.subr.mxu0 0.0
    %530 = vmatpush1.msra.mxu0 %v402
    %531 = vmatprep.subr.mxu0 0.0
    %532 = vmatpush1.msra.mxu0 %v403
    %533 = vmatprep.subr.mxu0 0.0
    %534 = vmatpush1.msra.mxu0 %v404
    %535 = vmatprep.subr.mxu0 0.0
    %536 = vmatpush1.msra.mxu0 %v405
    %537 = vmatprep.subr.mxu0 0.0
    %538 = vmatpush1.msra.mxu0 %v406
    %539 = vmatprep.subr.mxu0 0.0
    %540 = vmatpush1.msra.mxu0 0.0
    %541 = vmatprep.subr.mxu0 0.0
    %542 = vmatpush1.msra.mxu0 0.0
    %543 = vmatprep.subr.mxu0 0.0
    %544 = vmatpush1.msra.mxu0 0.0
    %545 = vmatprep.subr.mxu0 0.0
    %546 = vmatpush1.msra.mxu0 0.0
    %547 = vmatprep.subr.mxu0 0.0
    %548 = vmatpush1.msra.mxu0 0.0
    %549 = vmatprep.subr.mxu0 0.0
    %550 = vmatpush1.msra.mxu0 0.0
    %551 = vmatprep.subr.mxu0 0.0
    %552 = vmatpush1.msra.mxu0 0.0
    %553 = vmatprep.subr.mxu0 0.0
    %554 = vmatpush1.msra.mxu0 0.0
    %555 = vmatprep.subr.mxu0 0.0
    %556 = vmatpush1.msra.mxu0 0.0
    %557 = vmatprep.subr.mxu0 0.0
    %558 = vmatpush1.msra.mxu0 0.0
    %559 = vmatprep.subr.mxu0 0.0
    %560 = vmatpush1.msra.mxu0 0.0
    %561 = vmatprep.subr.mxu0 0.0
    %562 = vmatpush1.msra.mxu0 0.0
    %563 = vmatprep.subr.mxu0 0.0
    %564 = vmatpush1.msra.mxu0 0.0
    %565 = vmatprep.subr.mxu0 0.0
    %566 = vmatpush1.msra.mxu0 0.0
    %567 = vmatprep.subr.mxu0 0.0
    %568 = vmatpush1.msra.mxu0 0.0
    %569 = vmatprep.subr.mxu0 0.0
    %570 = vmatpush1.msra.mxu0 0.0
    %571 = vmatprep.subr.mxu0 0.0
    %572 = vmatpush1.msra.mxu0 0.0
    %573 = vmatprep.subr.mxu0 0.0
    %574 = vmatpush1.msra.mxu0 0.0
    %575 = vmatprep.subr.mxu0 0.0
    %576 = vmatpush1.msra.mxu0 0.0
    %577 = vmatprep.subr.mxu0 0.0
    %578 = vmatpush1.msra.mxu0 0.0
    %579 = vmatprep.subr.mxu0 0.0
    %580 = vmatpush1.msra.mxu0 0.0
    %581 = vmatprep.subr.mxu0 0.0
    %582 = vmatpush1.msra.mxu0 0.0
    %583 = vmatprep.subr.mxu0 0.0
    %584 = vmatpush1.msra.mxu0 0.0
    %585 = vmatprep.subr.mxu0 0.0
    %586 = vmatpush1.msra.mxu0 0.0
    %587 = vmatprep.mubr.f32.mxu0 0.0
    %588 = vmatmul.mubr.f32.gmra.mrb[0].mxu0 %v521
    %v589 = vpop.f32.mrb[0].mxu0
    %v590 = vadd.f32 %v412, %v589
    %v591 = vpop.f32.mrb[0].mxu0
    %592 = vdwg.mxu0
    %v593 = vxor.u32 %v590, 2147483648
    %v594 = vmul.f32 %v593, 1.442695
    %v595 = vpow.pop %v594
    %v596 = vadd.f32 %v595, 1.0
    %v597 = vrcp.pop %v596
    %v598 = vmul.f32 1.0, %v597
    %600 = vrot.lane.b32.xlu0 %v590, 32
    %v601 = vpop.permute.xlu0 %600
    %v603 = vmul.f32 %v598, %v601
    %605 = vrot.lane.b32.xlu0 %v603, 64
    %v606 = vpop.permute.xlu0 %605
    %v608 = vadd.f32 %v590, %v606
    %v609 = vtanh.pop %v608
    %v610 = vsub.f32 1.0, %v598
    %612 = vrot.lane.b32.xlu0 %v609, 96
    %v613 = vpop.permute.xlu0 %612
    %v615 = vmul.f32 %v610, %v613
    %v616 = vmul.f32 %v598, 0.0
    %v617 = vadd.f32 %v615, %v616
    %v618 = vsel %vm414, %v516, 0
    %620 = vmatprep.subr.mxu0 0.0
    %621 = vmatpush1.msra.mxu0 %v388
    %622 = vmatprep.subr.mxu0 0.0
    %623 = vmatpush1.msra.mxu0 %v389
    %624 = vmatprep.subr.mxu0 0.0
    %625 = vmatpush1.msra.mxu0 %v390
    %626 = vmatprep.subr.mxu0 0.0
    %627 = vmatpush1.msra.mxu0 %v391
    %628 = vmatprep.subr.mxu0 0.0
    %629 = vmatpush1.msra.mxu0 0.0
    %630 = vmatprep.subr.mxu0 0.0
    %631 = vmatpush1.msra.mxu0 0.0
    %632 = vmatprep.subr.mxu0 0.0
    %633 = vmatpush1.msra.mxu0 0.0
    %634 = vmatprep.subr.mxu0 0.0
    %635 = vmatpush1.msra.mxu0 0.0
    %636 = vmatprep.subr.mxu0 0.0
    %637 = vmatpush1.msra.mxu0 0.0
    %638 = vmatprep.subr.mxu0 0.0
    %639 = vmatpush1.msra.mxu0 0.0
    %640 = vmatprep.subr.mxu0 0.0
    %641 = vmatpush1.msra.mxu0 0.0
    %642 = vmatprep.subr.mxu0 0.0
    %643 = vmatpush1.msra.mxu0 0.0
    %644 = vmatprep.subr.mxu0 0.0
    %645 = vmatpush1.msra.mxu0 0.0
    %646 = vmatprep.subr.mxu0 0.0
    %647 = vmatpush1.msra.mxu0 0.0
    %648 = vmatprep.subr.mxu0 0.0
    %649 = vmatpush1.msra.mxu0 0.0
    %650 = vmatprep.subr.mxu0 0.0
    %651 = vmatpush1.msra.mxu0 0.0
    %652 = vmatprep.subr.mxu0 0.0
    %653 = vmatpush1.msra.mxu0 0.0
    %654 = vmatprep.subr.mxu0 0.0
    %655 = vmatpush1.msra.mxu0 0.0
    %656 = vmatprep.subr.mxu0 0.0
    %657 = vmatpush1.msra.mxu0 0.0
    %658 = vmatprep.subr.mxu0 0.0
    %659 = vmatpush1.msra.mxu0 0.0
    %660 = vmatprep.subr.mxu0 0.0
    %661 = vmatpush1.msra.mxu0 0.0
    %662 = vmatprep.subr.mxu0 0.0
    %663 = vmatpush1.msra.mxu0 0.0
    %664 = vmatprep.subr.mxu0 0.0
    %665 = vmatpush1.msra.mxu0 0.0
    %666 = vmatprep.subr.mxu0 0.0
    %667 = vmatpush1.msra.mxu0 0.0
    %668 = vmatprep.subr.mxu0 0.0
    %669 = vmatpush1.msra.mxu0 0.0
    %670 = vmatprep.subr.mxu0 0.0
    %671 = vmatpush1.msra.mxu0 0.0
    %672 = vmatprep.subr.mxu0 0.0
    %673 = vmatpush1.msra.mxu0 0.0
    %674 = vmatprep.subr.mxu0 0.0
    %675 = vmatpush1.msra.mxu0 0.0
    %676 = vmatprep.subr.mxu0 0.0
    %677 = vmatpush1.msra.mxu0 0.0
    %678 = vmatprep.subr.mxu0 0.0
    %679 = vmatpush1.msra.mxu0 0.0
    %680 = vmatprep.subr.mxu0 0.0
    %681 = vmatpush1.msra.mxu0 0.0
    %682 = vmatprep.subr.mxu0 0.0
    %683 = vmatpush1.msra.mxu0 0.0
    %684 = vmatprep.mubr.f32.mxu0 0.0
    %685 = vmatmul.mubr.f32.gmra.mrb[0].mxu0 %v618
    %v686 = vpop.f32.mrb[0].mxu0
    %v687 = vadd.f32 %v397, %v686
    %v688 = vpop.f32.mrb[0].mxu0
    %689 = vdwg.mxu0
    %691 = vrot.lane.b32.xlu0 %v687, 96
    %v692 = vpop.permute.xlu0 %691
    %v694 = vadd.f32 %v242, %v692
    %v695 = vadd.f32 %v244, %v692
    %v696 = vxor.u32 %v694, 2147483648
    %v697 = vxor.u32 %v695, 2147483648
    %v698 = vmul.f32 %v696, 1.442695
    %v699 = vpow.pop %v698
    %v700 = vmul.f32 %v697, 1.442695
    %v701 = vpow.pop %v700
    %v702 = vadd.f32 %v699, 1.0
    %v703 = vadd.f32 %v701, 1.0
    %v704 = vrcp.pop %v702
    %v705 = vmul.f32 1.0, %v704
    %v706 = vrcp.pop %v703
    %v707 = vmul.f32 1.0, %v706
    %708 = vrot.lane.b32.xlu0 %v687, 32
    %v709 = vpop.permute.xlu0 %708
    %v711 = vmul.f32 %v705, %v709
    %713 = vrot.lane.b32.xlu0 %v711, 64
    %v714 = vpop.permute.xlu0 %713
    %v716 = vadd.f32 %v244, %v714
    %v717 = vtanh.pop %v716
    %v718 = vsub.f32 1.0, %v707
    %720 = vrot.lane.b32.xlu0 %v717, 96
    %v721 = vpop.permute.xlu0 %720
    %v723 = vmul.f32 %v718, %v721
    %v724 = vmul.f32 %v707, %v516
    %v725 = vadd.f32 %v723, %v724
    %v726 = vsel %vm414, %v725, %v617
    %v728 = vsel %vm519, %v726, 0
    %730 = vmatprep.subr.mxu0 0.0
    %731 = vmatpush1.msra.mxu0 %v399
    %732 = vmatprep.subr.mxu0 0.0
    %733 = vmatpush1.msra.mxu0 %v400
    %734 = vmatprep.subr.mxu0 0.0
    %735 = vmatpush1.msra.mxu0 %v401
    %736 = vmatprep.subr.mxu0 0.0
    %737 = vmatpush1.msra.mxu0 %v402
    %738 = vmatprep.subr.mxu0 0.0
    %739 = vmatpush1.msra.mxu0 %v403
    %740 = vmatprep.subr.mxu0 0.0
    %741 = vmatpush1.msra.mxu0 %v404
    %742 = vmatprep.subr.mxu0 0.0
    %743 = vmatpush1.msra.mxu0 %v405
    %744 = vmatprep.subr.mxu0 0.0
    %745 = vmatpush1.msra.mxu0 %v406
    %746 = vmatprep.subr.mxu0 0.0
    %747 = vmatpush1.msra.mxu0 0.0
    %748 = vmatprep.subr.mxu0 0.0
    %749 = vmatpush1.msra.mxu0 0.0
    %750 = vmatprep.subr.mxu0 0.0
    %751 = vmatpush1.msra.mxu0 0.0
    %752 = vmatprep.subr.mxu0 0.0
    %753 = vmatpush1.msra.mxu0 0.0
    %754 = vmatprep.subr.mxu0 0.0
    %755 = vmatpush1.msra.mxu0 0.0
    %756 = vmatprep.subr.mxu0 0.0
    %757 = vmatpush1.msra.mxu0 0.0
    %758 = vmatprep.subr.mxu0 0.0
    %759 = vmatpush1.msra.mxu0 0.0
    %760 = vmatprep.subr.mxu0 0.0
    %761 = vmatpush1.msra.mxu0 0.0
    %762 = vmatprep.subr.mxu0 0.0
    %763 = vmatpush1.msra.mxu0 0.0
    %764 = vmatprep.subr.mxu0 0.0
    %765 = vmatpush1.msra.mxu0 0.0
    %766 = vmatprep.subr.mxu0 0.0
    %767 = vmatpush1.msra.mxu0 0.0
    %768 = vmatprep.subr.mxu0 0.0
    %769 = vmatpush1.msra.mxu0 0.0
    %770 = vmatprep.subr.mxu0 0.0
    %771 = vmatpush1.msra.mxu0 0.0
    %772 = vmatprep.subr.mxu0 0.0
    %773 = vmatpush1.msra.mxu0 0.0
    %774 = vmatprep.subr.mxu0 0.0
    %775 = vmatpush1.msra.mxu0 0.0
    %776 = vmatprep.subr.mxu0 0.0
    %777 = vmatpush1.msra.mxu0 0.0
    %778 = vmatprep.subr.mxu0 0.0
    %779 = vmatpush1.msra.mxu0 0.0
    %780 = vmatprep.subr.mxu0 0.0
    %781 = vmatpush1.msra.mxu0 0.0
    %782 = vmatprep.subr.mxu0 0.0
    %783 = vmatpush1.msra.mxu0 0.0
    %784 = vmatprep.subr.mxu0 0.0
    %785 = vmatpush1.msra.mxu0 0.0
    %786 = vmatprep.subr.mxu0 0.0
    %787 = vmatpush1.msra.mxu0 0.0
    %788 = vmatprep.subr.mxu0 0.0
    %789 = vmatpush1.msra.mxu0 0.0
    %790 = vmatprep.subr.mxu0 0.0
    %791 = vmatpush1.msra.mxu0 0.0
    %792 = vmatprep.subr.mxu0 0.0
    %793 = vmatpush1.msra.mxu0 0.0
    %794 = vmatprep.mubr.f32.mxu0 0.0
    %795 = vmatmul.mubr.f32.gmra.mrb[0].mxu0 %v728
    %v796 = vpop.f32.mrb[0].mxu0
    %v797 = vadd.f32 %v412, %v796
    %v798 = vpop.f32.mrb[0].mxu0
    %799 = vdwg.mxu0
    %v800 = vxor.u32 %v797, 2147483648
    %v801 = vmul.f32 %v800, 1.442695
    %v802 = vpow.pop %v801
    %v803 = vadd.f32 %v802, 1.0
    %v804 = vrcp.pop %v803
    %v805 = vmul.f32 1.0, %v804
    %807 = vrot.lane.b32.xlu0 %v797, 32
    %v808 = vpop.permute.xlu0 %807
    %v810 = vmul.f32 %v805, %v808
    %812 = vrot.lane.b32.xlu0 %v810, 64
    %v813 = vpop.permute.xlu0 %812
    %v815 = vadd.f32 %v797, %v813
    %v816 = vtanh.pop %v815
    %v817 = vsub.f32 1.0, %v805
    %819 = vrot.lane.b32.xlu0 %v816, 96
    %v820 = vpop.permute.xlu0 %819
    %v822 = vmul.f32 %v817, %v820
    %v823 = vmul.f32 %v805, %v617
    %v824 = vadd.f32 %v822, %v823
    %v826 = vsel %vm414, %v725, 0
    %828 = vmatprep.subr.mxu0 0.0
    %829 = vmatpush1.msra.mxu0 %v388
    %830 = vmatprep.subr.mxu0 0.0
    %831 = vmatpush1.msra.mxu0 %v389
    %832 = vmatprep.subr.mxu0 0.0
    %833 = vmatpush1.msra.mxu0 %v390
    %834 = vmatprep.subr.mxu0 0.0
    %835 = vmatpush1.msra.mxu0 %v391
    %836 = vmatprep.subr.mxu0 0.0
    %837 = vmatpush1.msra.mxu0 0.0
    %838 = vmatprep.subr.mxu0 0.0
    %839 = vmatpush1.msra.mxu0 0.0
    %840 = vmatprep.subr.mxu0 0.0
    %841 = vmatpush1.msra.mxu0 0.0
    %842 = vmatprep.subr.mxu0 0.0
    %843 = vmatpush1.msra.mxu0 0.0
    %844 = vmatprep.subr.mxu0 0.0
    %845 = vmatpush1.msra.mxu0 0.0
    %846 = vmatprep.subr.mxu0 0.0
    %847 = vmatpush1.msra.mxu0 0.0
    %848 = vmatprep.subr.mxu0 0.0
    %849 = vmatpush1.msra.mxu0 0.0
    %850 = vmatprep.subr.mxu0 0.0
    %851 = vmatpush1.msra.mxu0 0.0
    %852 = vmatprep.subr.mxu0 0.0
    %853 = vmatpush1.msra.mxu0 0.0
    %854 = vmatprep.subr.mxu0 0.0
    %855 = vmatpush1.msra.mxu0 0.0
    %856 = vmatprep.subr.mxu0 0.0
    %857 = vmatpush1.msra.mxu0 0.0
    %858 = vmatprep.subr.mxu0 0.0
    %859 = vmatpush1.msra.mxu0 0.0
    %860 = vmatprep.subr.mxu0 0.0
    %861 = vmatpush1.msra.mxu0 0.0
    %862 = vmatprep.subr.mxu0 0.0
    %863 = vmatpush1.msra.mxu0 0.0
    %864 = vmatprep.subr.mxu0 0.0
    %865 = vmatpush1.msra.mxu0 0.0
    %866 = vmatprep.subr.mxu0 0.0
    %867 = vmatpush1.msra.mxu0 0.0
    %868 = vmatprep.subr.mxu0 0.0
    %869 = vmatpush1.msra.mxu0 0.0
    %870 = vmatprep.subr.mxu0 0.0
    %871 = vmatpush1.msra.mxu0 0.0
    %872 = vmatprep.subr.mxu0 0.0
    %873 = vmatpush1.msra.mxu0 0.0
    %874 = vmatprep.subr.mxu0 0.0
    %875 = vmatpush1.msra.mxu0 0.0
    %876 = vmatprep.subr.mxu0 0.0
    %877 = vmatpush1.msra.mxu0 0.0
    %878 = vmatprep.subr.mxu0 0.0
    %879 = vmatpush1.msra.mxu0 0.0
    %880 = vmatprep.subr.mxu0 0.0
    %881 = vmatpush1.msra.mxu0 0.0
    %882 = vmatprep.subr.mxu0 0.0
    %883 = vmatpush1.msra.mxu0 0.0
    %884 = vmatprep.subr.mxu0 0.0
    %885 = vmatpush1.msra.mxu0 0.0
    %886 = vmatprep.subr.mxu0 0.0
    %887 = vmatpush1.msra.mxu0 0.0
    %888 = vmatprep.subr.mxu0 0.0
    %889 = vmatpush1.msra.mxu0 0.0
    %890 = vmatprep.subr.mxu0 0.0
    %891 = vmatpush1.msra.mxu0 0.0
    %892 = vmatprep.mubr.f32.mxu0 0.0
    %893 = vmatmul.mubr.f32.gmra.mrb[0].mxu0 %v826
    %v894 = vpop.f32.mrb[0].mxu0
    %v895 = vadd.f32 %v397, %v894
    %v896 = vpop.f32.mrb[0].mxu0
    %897 = vdwg.mxu0
    %899 = vrot.lane.b32.xlu0 %v895, 64
    %v900 = vpop.permute.xlu0 %899
    %v902 = vadd.f32 %v244, %v900
    %v903 = vxor.u32 %v902, 2147483648
    %v904 = vmul.f32 %v903, 1.442695
    %v905 = vpow.pop %v904
    %v906 = vadd.f32 %v905, 1.0
    %v907 = vrcp.pop %v906
    %v908 = vmul.f32 1.0, %v907
    %v909 = vmul.f32 %v908, %v895
    %911 = vrot.lane.b32.xlu0 %v909, 64
    %v912 = vpop.permute.xlu0 %911
    %v914 = vadd.f32 %v313, %v912
    %v915 = vtanh.pop %v914
    %v916 = vsub.f32 1.0, %v908
    %918 = vrot.lane.b32.xlu0 %v915, 96
    %v919 = vpop.permute.xlu0 %918
    %v921 = vmul.f32 %v916, %v919
    %922 = vrot.lane.b32.xlu0 %v725, 96
    %v923 = vpop.permute.xlu0 %922
    %v925 = vmul.f32 %v908, %v923
    %v926 = vadd.f32 %v921, %v925
    %928 = vrot.lane.b32.xlu0 %v926, 32
    %v929 = vpop.permute.xlu0 %928
    %v931 = vsel %vm414, %v929, %v824
    %v933 = vsel %vm519, %v931, 0
    %935 = vmatprep.subr.mxu0 0.0
    %936 = vmatpush1.msra.mxu0 %v399
    %937 = vmatprep.subr.mxu0 0.0
    %938 = vmatpush1.msra.mxu0 %v400
    %939 = vmatprep.subr.mxu0 0.0
    %940 = vmatpush1.msra.mxu0 %v401
    %941 = vmatprep.subr.mxu0 0.0
    %942 = vmatpush1.msra.mxu0 %v402
    %943 = vmatprep.subr.mxu0 0.0
    %944 = vmatpush1.msra.mxu0 %v403
    %945 = vmatprep.subr.mxu0 0.0
    %946 = vmatpush1.msra.mxu0 %v404
    %947 = vmatprep.subr.mxu0 0.0
    %948 = vmatpush1.msra.mxu0 %v405
    %949 = vmatprep.subr.mxu0 0.0
    %950 = vmatpush1.msra.mxu0 %v406
    %951 = vmatprep.subr.mxu0 0.0
    %952 = vmatpush1.msra.mxu0 0.0
    %953 = vmatprep.subr.mxu0 0.0
    %954 = vmatpush1.msra.mxu0 0.0
    %955 = vmatprep.subr.mxu0 0.0
    %956 = vmatpush1.msra.mxu0 0.0
    %957 = vmatprep.subr.mxu0 0.0
    %958 = vmatpush1.msra.mxu0 0.0
    %959 = vmatprep.subr.mxu0 0.0
    %960 = vmatpush1.msra.mxu0 0.0
    %961 = vmatprep.subr.mxu0 0.0
    %962 = vmatpush1.msra.mxu0 0.0
    %963 = vmatprep.subr.mxu0 0.0
    %964 = vmatpush1.msra.mxu0 0.0
    %965 = vmatprep.subr.mxu0 0.0
    %966 = vmatpush1.msra.mxu0 0.0
    %967 = vmatprep.subr.mxu0 0.0
    %968 = vmatpush1.msra.mxu0 0.0
    %969 = vmatprep.subr.mxu0 0.0
    %970 = vmatpush1.msra.mxu0 0.0
    %971 = vmatprep.subr.mxu0 0.0
    %972 = vmatpush1.msra.mxu0 0.0
    %973 = vmatprep.subr.mxu0 0.0
    %974 = vmatpush1.msra.mxu0 0.0
    %975 = vmatprep.subr.mxu0 0.0
    %976 = vmatpush1.msra.mxu0 0.0
    %977 = vmatprep.subr.mxu0 0.0
    %978 = vmatpush1.msra.mxu0 0.0
    %979 = vmatprep.subr.mxu0 0.0
    %980 = vmatpush1.msra.mxu0 0.0
    %981 = vmatprep.subr.mxu0 0.0
    %982 = vmatpush1.msra.mxu0 0.0
    %983 = vmatprep.subr.mxu0 0.0
    %984 = vmatpush1.msra.mxu0 0.0
    %985 = vmatprep.subr.mxu0 0.0
    %986 = vmatpush1.msra.mxu0 0.0
    %987 = vmatprep.subr.mxu0 0.0
    %988 = vmatpush1.msra.mxu0 0.0
    %989 = vmatprep.subr.mxu0 0.0
    %990 = vmatpush1.msra.mxu0 0.0
    %991 = vmatprep.subr.mxu0 0.0
    %992 = vmatpush1.msra.mxu0 0.0
    %993 = vmatprep.subr.mxu0 0.0
    %994 = vmatpush1.msra.mxu0 0.0
    %995 = vmatprep.subr.mxu0 0.0
    %996 = vmatpush1.msra.mxu0 0.0
    %997 = vmatprep.subr.mxu0 0.0
    %998 = vmatpush1.msra.mxu0 0.0
    %999 = vmatprep.mubr.f32.mxu0 0.0
    %1000 = vmatmul.mubr.f32.gmra.mrb[0].mxu0 %v933
    %v1001 = vpop.f32.mrb[0].mxu0
    %v1002 = vadd.f32 %v412, %v1001
    %v1003 = vpop.f32.mrb[0].mxu0
    %1004 = vdwg.mxu0
    %v1005 = vxor.u32 %v1002, 2147483648
    %v1006 = vmul.f32 %v1005, 1.442695
    %v1007 = vpow.pop %v1006
    %v1008 = vadd.f32 %v1007, 1.0
    %v1009 = vrcp.pop %v1008
    %v1010 = vmul.f32 1.0, %v1009
    %1012 = vrot.lane.b32.xlu0 %v1002, 32
    %v1013 = vpop.permute.xlu0 %1012
    %v1015 = vmul.f32 %v1010, %v1013
    %1017 = vrot.lane.b32.xlu0 %v1015, 64
    %v1018 = vpop.permute.xlu0 %1017
    %v1020 = vadd.f32 %v1002, %v1018
    %v1021 = vtanh.pop %v1020
    %v1022 = vsub.f32 1.0, %v1010
    %1024 = vrot.lane.b32.xlu0 %v1021, 96
    %v1025 = vpop.permute.xlu0 %1024
    %v1027 = vmul.f32 %v1022, %v1025
    %v1028 = vmul.f32 %v1010, %v824
    %v1029 = vadd.f32 %v1027, %v1028
    %v1030 = vsel %vm414, %v929, 0
    %1032 = vmatprep.subr.mxu0 0.0
    %1033 = vmatpush1.msra.mxu0 %v388
    %1034 = vmatprep.subr.mxu0 0.0
    %1035 = vmatpush1.msra.mxu0 %v389
    %1036 = vmatprep.subr.mxu0 0.0
    %1037 = vmatpush1.msra.mxu0 %v390
    %1038 = vmatprep.subr.mxu0 0.0
    %1039 = vmatpush1.msra.mxu0 %v391
    %1040 = vmatprep.subr.mxu0 0.0
    %1041 = vmatpush1.msra.mxu0 0.0
    %1042 = vmatprep.subr.mxu0 0.0
    %1043 = vmatpush1.msra.mxu0 0.0
    %1044 = vmatprep.subr.mxu0 0.0
    %1045 = vmatpush1.msra.mxu0 0.0
    %1046 = vmatprep.subr.mxu0 0.0
    %1047 = vmatpush1.msra.mxu0 0.0
    %1048 = vmatprep.subr.mxu0 0.0
    %1049 = vmatpush1.msra.mxu0 0.0
    %1050 = vmatprep.subr.mxu0 0.0
    %1051 = vmatpush1.msra.mxu0 0.0
    %1052 = vmatprep.subr.mxu0 0.0
    %1053 = vmatpush1.msra.mxu0 0.0
    %1054 = vmatprep.subr.mxu0 0.0
    %1055 = vmatpush1.msra.mxu0 0.0
    %1056 = vmatprep.subr.mxu0 0.0
    %1057 = vmatpush1.msra.mxu0 0.0
    %1058 = vmatprep.subr.mxu0 0.0
    %1059 = vmatpush1.msra.mxu0 0.0
    %1060 = vmatprep.subr.mxu0 0.0
    %1061 = vmatpush1.msra.mxu0 0.0
    %1062 = vmatprep.subr.mxu0 0.0
    %1063 = vmatpush1.msra.mxu0 0.0
    %1064 = vmatprep.subr.mxu0 0.0
    %1065 = vmatpush1.msra.mxu0 0.0
    %1066 = vmatprep.subr.mxu0 0.0
    %1067 = vmatpush1.msra.mxu0 0.0
    %1068 = vmatprep.subr.mxu0 0.0
    %1069 = vmatpush1.msra.mxu0 0.0
    %1070 = vmatprep.subr.mxu0 0.0
    %1071 = vmatpush1.msra.mxu0 0.0
    %1072 = vmatprep.subr.mxu0 0.0
    %1073 = vmatpush1.msra.mxu0 0.0
    %1074 = vmatprep.subr.mxu0 0.0
    %1075 = vmatpush1.msra.mxu0 0.0
    %1076 = vmatprep.subr.mxu0 0.0
    %1077 = vmatpush1.msra.mxu0 0.0
    %1078 = vmatprep.subr.mxu0 0.0
    %1079 = vmatpush1.msra.mxu0 0.0
    %1080 = vmatprep.subr.mxu0 0.0
    %1081 = vmatpush1.msra.mxu0 0.0
    %1082 = vmatprep.subr.mxu0 0.0
    %1083 = vmatpush1.msra.mxu0 0.0
    %1084 = vmatprep.subr.mxu0 0.0
    %1085 = vmatpush1.msra.mxu0 0.0
    %1086 = vmatprep.subr.mxu0 0.0
    %1087 = vmatpush1.msra.mxu0 0.0
    %1088 = vmatprep.subr.mxu0 0.0
    %1089 = vmatpush1.msra.mxu0 0.0
    %1090 = vmatprep.subr.mxu0 0.0
    %1091 = vmatpush1.msra.mxu0 0.0
    %1092 = vmatprep.subr.mxu0 0.0
    %1093 = vmatpush1.msra.mxu0 0.0
    %1094 = vmatprep.subr.mxu0 0.0
    %1095 = vmatpush1.msra.mxu0 0.0
    %1096 = vmatprep.mubr.f32.mxu0 0.0
    %1097 = vmatmul.mubr.f32.gmra.mrb[0].mxu0 %v1030
    %v1098 = vpop.f32.mrb[0].mxu0
    %v1099 = vadd.f32 %v397, %v1098
    %v1100 = vpop.f32.mrb[0].mxu0
    %1101 = vdwg.mxu0
    %1103 = vrot.lane.b32.xlu0 %v1099, 32
    %v1104 = vpop.permute.xlu0 %1103
    %v1106 = vadd.f32 %v313, %v1104
    %v1107 = vxor.u32 %v1106, 2147483648
    %v1108 = vmul.f32 %v1107, 1.442695
    %v1109 = vpow.pop %v1108
    %v1110 = vadd.f32 %v1109, 1.0
    %v1111 = vrcp.pop %v1110
    %v1112 = vmul.f32 1.0, %v1111
    %1113 = vrot.lane.b32.xlu0 %v1099, 96
    %v1114 = vpop.permute.xlu0 %1113
    %v1116 = vmul.f32 %v1112, %v1114
    %1118 = vrot.lane.b32.xlu0 %v1116, 64
    %v1119 = vpop.permute.xlu0 %1118
    %v1121 = vadd.f32 %v313, %v1119
    %v1122 = vtanh.pop %v1121
    %v1123 = vsub.f32 1.0, %v1112
    %1125 = vrot.lane.b32.xlu0 %v1122, 96
    %v1126 = vpop.permute.xlu0 %1125
    %v1128 = vmul.f32 %v1123, %v1126
    %1129 = vrot.lane.b32.xlu0 %v926, 96
    %v1130 = vpop.permute.xlu0 %1129
    %v1132 = vmul.f32 %v1112, %v1130
    %v1133 = vadd.f32 %v1128, %v1132
    %1135 = vrot.lane.b32.xlu0 %v1133, 64
    %v1136 = vpop.permute.xlu0 %1135
    %v1138 = vsel %vm414, %v1136, %v1029
    %v1140 = vsel %vm519, %v1138, 0
    %1142 = vmatprep.subr.mxu0 0.0
    %1143 = vmatpush1.msra.mxu0 %v399
    %1144 = vmatprep.subr.mxu0 0.0
    %1145 = vmatpush1.msra.mxu0 %v400
    %1146 = vmatprep.subr.mxu0 0.0
    %1147 = vmatpush1.msra.mxu0 %v401
    %1148 = vmatprep.subr.mxu0 0.0
    %1149 = vmatpush1.msra.mxu0 %v402
    %1150 = vmatprep.subr.mxu0 0.0
    %1151 = vmatpush1.msra.mxu0 %v403
    %1152 = vmatprep.subr.mxu0 0.0
    %1153 = vmatpush1.msra.mxu0 %v404
    %1154 = vmatprep.subr.mxu0 0.0
    %1155 = vmatpush1.msra.mxu0 %v405
    %1156 = vmatprep.subr.mxu0 0.0
    %1157 = vmatpush1.msra.mxu0 %v406
    %1158 = vmatprep.subr.mxu0 0.0
    %1159 = vmatpush1.msra.mxu0 0.0
    %1160 = vmatprep.subr.mxu0 0.0
    %1161 = vmatpush1.msra.mxu0 0.0
    %1162 = vmatprep.subr.mxu0 0.0
    %1163 = vmatpush1.msra.mxu0 0.0
    %1164 = vmatprep.subr.mxu0 0.0
    %1165 = vmatpush1.msra.mxu0 0.0
    %1166 = vmatprep.subr.mxu0 0.0
    %1167 = vmatpush1.msra.mxu0 0.0
    %1168 = vmatprep.subr.mxu0 0.0
    %1169 = vmatpush1.msra.mxu0 0.0
    %1170 = vmatprep.subr.mxu0 0.0
    %1171 = vmatpush1.msra.mxu0 0.0
    %1172 = vmatprep.subr.mxu0 0.0
    %1173 = vmatpush1.msra.mxu0 0.0
    %1174 = vmatprep.subr.mxu0 0.0
    %1175 = vmatpush1.msra.mxu0 0.0
    %1176 = vmatprep.subr.mxu0 0.0
    %1177 = vmatpush1.msra.mxu0 0.0
    %1178 = vmatprep.subr.mxu0 0.0
    %1179 = vmatpush1.msra.mxu0 0.0
    %1180 = vmatprep.subr.mxu0 0.0
    %1181 = vmatpush1.msra.mxu0 0.0
    %1182 = vmatprep.subr.mxu0 0.0
    %1183 = vmatpush1.msra.mxu0 0.0
    %1184 = vmatprep.subr.mxu0 0.0
    %1185 = vmatpush1.msra.mxu0 0.0
    %1186 = vmatprep.subr.mxu0 0.0
    %1187 = vmatpush1.msra.mxu0 0.0
    %1188 = vmatprep.subr.mxu0 0.0
    %1189 = vmatpush1.msra.mxu0 0.0
    %1190 = vmatprep.subr.mxu0 0.0
    %1191 = vmatpush1.msra.mxu0 0.0
    %1192 = vmatprep.subr.mxu0 0.0
    %1193 = vmatpush1.msra.mxu0 0.0
    %1194 = vmatprep.subr.mxu0 0.0
    %1195 = vmatpush1.msra.mxu0 0.0
    %1196 = vmatprep.subr.mxu0 0.0
    %1197 = vmatpush1.msra.mxu0 0.0
    %1198 = vmatprep.subr.mxu0 0.0
    %1199 = vmatpush1.msra.mxu0 0.0
    %1200 = vmatprep.subr.mxu0 0.0
    %1201 = vmatpush1.msra.mxu0 0.0
    %1202 = vmatprep.subr.mxu0 0.0
    %1203 = vmatpush1.msra.mxu0 0.0
    %1204 = vmatprep.subr.mxu0 0.0
    %1205 = vmatpush1.msra.mxu0 0.0
    %1206 = vmatprep.mubr.f32.mxu0 0.0
    %1207 = vmatmul.mubr.f32.gmra.mrb[0].mxu0 %v1140
    %v1208 = vpop.f32.mrb[0].mxu0
    %v1209 = vadd.f32 %v412, %v1208
    %v1210 = vpop.f32.mrb[0].mxu0
    %1211 = vdwg.mxu0
    %v1212 = vxor.u32 %v1209, 2147483648
    %v1213 = vmul.f32 %v1212, 1.442695
    %v1214 = vpow.pop %v1213
    %v1215 = vadd.f32 %v1214, 1.0
    %v1216 = vrcp.pop %v1215
    %v1217 = vmul.f32 1.0, %v1216
    %1219 = vrot.lane.b32.xlu0 %v1209, 32
    %v1220 = vpop.permute.xlu0 %1219
    %v1222 = vmul.f32 %v1217, %v1220
    %1224 = vrot.lane.b32.xlu0 %v1222, 64
    %v1225 = vpop.permute.xlu0 %1224
    %v1227 = vadd.f32 %v1209, %v1225
    %v1228 = vtanh.pop %v1227
    %v1229 = vsub.f32 1.0, %v1217
    %1231 = vrot.lane.b32.xlu0 %v1228, 96
    %v1232 = vpop.permute.xlu0 %1231
    %v1234 = vmul.f32 %v1229, %v1232
    %v1235 = vmul.f32 %v1217, %v1029
    %v1236 = vadd.f32 %v1234, %v1235
    %v1237 = vsel %vm414, %v1136, 0
    %1239 = vmatprep.subr.mxu0 0.0
    %1240 = vmatpush1.msra.mxu0 %v388
    %1241 = vmatprep.subr.mxu0 0.0
    %1242 = vmatpush1.msra.mxu0 %v389
    %1243 = vmatprep.subr.mxu0 0.0
    %1244 = vmatpush1.msra.mxu0 %v390
    %1245 = vmatprep.subr.mxu0 0.0
    %1246 = vmatpush1.msra.mxu0 %v391
    %1247 = vmatprep.subr.mxu0 0.0
    %1248 = vmatpush1.msra.mxu0 0.0
    %1249 = vmatprep.subr.mxu0 0.0
    %1250 = vmatpush1.msra.mxu0 0.0
    %1251 = vmatprep.subr.mxu0 0.0
    %1252 = vmatpush1.msra.mxu0 0.0
    %1253 = vmatprep.subr.mxu0 0.0
    %1254 = vmatpush1.msra.mxu0 0.0
    %1255 = vmatprep.subr.mxu0 0.0
    %1256 = vmatpush1.msra.mxu0 0.0
    %1257 = vmatprep.subr.mxu0 0.0
    %1258 = vmatpush1.msra.mxu0 0.0
    %1259 = vmatprep.subr.mxu0 0.0
    %1260 = vmatpush1.msra.mxu0 0.0
    %1261 = vmatprep.subr.mxu0 0.0
    %1262 = vmatpush1.msra.mxu0 0.0
    %1263 = vmatprep.subr.mxu0 0.0
    %1264 = vmatpush1.msra.mxu0 0.0
    %1265 = vmatprep.subr.mxu0 0.0
    %1266 = vmatpush1.msra.mxu0 0.0
    %1267 = vmatprep.subr.mxu0 0.0
    %1268 = vmatpush1.msra.mxu0 0.0
    %1269 = vmatprep.subr.mxu0 0.0
    %1270 = vmatpush1.msra.mxu0 0.0
    %1271 = vmatprep.subr.mxu0 0.0
    %1272 = vmatpush1.msra.mxu0 0.0
    %1273 = vmatprep.subr.mxu0 0.0
    %1274 = vmatpush1.msra.mxu0 0.0
    %1275 = vmatprep.subr.mxu0 0.0
    %1276 = vmatpush1.msra.mxu0 0.0
    %1277 = vmatprep.subr.mxu0 0.0
    %1278 = vmatpush1.msra.mxu0 0.0
    %1279 = vmatprep.subr.mxu0 0.0
    %1280 = vmatpush1.msra.mxu0 0.0
    %1281 = vmatprep.subr.mxu0 0.0
    %1282 = vmatpush1.msra.mxu0 0.0
    %1283 = vmatprep.subr.mxu0 0.0
    %1284 = vmatpush1.msra.mxu0 0.0
    %1285 = vmatprep.subr.mxu0 0.0
    %1286 = vmatpush1.msra.mxu0 0.0
    %1287 = vmatprep.subr.mxu0 0.0
    %1288 = vmatpush1.msra.mxu0 0.0
    %1289 = vmatprep.subr.mxu0 0.0
    %1290 = vmatpush1.msra.mxu0 0.0
    %1291 = vmatprep.subr.mxu0 0.0
    %1292 = vmatpush1.msra.mxu0 0.0
    %1293 = vmatprep.subr.mxu0 0.0
    %1294 = vmatpush1.msra.mxu0 0.0
    %1295 = vmatprep.subr.mxu0 0.0
    %1296 = vmatpush1.msra.mxu0 0.0
    %1297 = vmatprep.subr.mxu0 0.0
    %1298 = vmatpush1.msra.mxu0 0.0
    %1299 = vmatprep.subr.mxu0 0.0
    %1300 = vmatpush1.msra.mxu0 0.0
    %1301 = vmatprep.subr.mxu0 0.0
    %1302 = vmatpush1.msra.mxu0 0.0
    %1303 = vmatprep.mubr.f32.mxu0 0.0
    %1304 = vmatmul.mubr.f32.gmra.mrb[0].mxu0 %v1237
    %v1305 = vpop.f32.mrb[0].mxu0
    %v1306 = vadd.f32 %v397, %v1305
    %v1307 = vpop.f32.mrb[0].mxu0
    %1308 = vdwg.mxu0
    %v1309 = vadd.f32 %v315, %v1306
    %v1310 = vxor.u32 %v1309, 2147483648
    %v1311 = vmul.f32 %v1310, 1.442695
    %v1312 = vpow.pop %v1311
    %v1313 = vadd.f32 %v1312, 1.0
    %v1314 = vrcp.pop %v1313
    %v1315 = vmul.f32 1.0, %v1314
    %1317 = vrot.lane.b32.xlu0 %v1306, 64
    %v1318 = vpop.permute.xlu0 %1317
    %v1320 = vmul.f32 %v1315, %v1318
    %1322 = vrot.lane.b32.xlu0 %v1320, 64
    %v1323 = vpop.permute.xlu0 %1322
    %v1325 = vadd.f32 %v315, %v1323
    %v1326 = vtanh.pop %v1325
    %v1327 = vsub.f32 1.0, %v1315
    %1329 = vrot.lane.b32.xlu0 %v1326, 96
    %v1330 = vpop.permute.xlu0 %1329
    %v1332 = vmul.f32 %v1327, %v1330
    %1333 = vrot.lane.b32.xlu0 %v1133, 96
    %v1334 = vpop.permute.xlu0 %1333
    %v1336 = vmul.f32 %v1315, %v1334
    %v1337 = vadd.f32 %v1332, %v1336
    %1339 = vrot.lane.b32.xlu0 %v1337, 96
    %v1340 = vpop.permute.xlu0 %1339
    %v1342 = vsel %vm414, %v1340, %v1236
    %v1344 = vsel %vm519, %v1342, 0
    %1346 = vmatprep.subr.mxu0 0.0
    %1347 = vmatpush1.msra.mxu0 %v399
    %1348 = vmatprep.subr.mxu0 0.0
    %1349 = vmatpush1.msra.mxu0 %v400
    %1350 = vmatprep.subr.mxu0 0.0
    %1351 = vmatpush1.msra.mxu0 %v401
    %1352 = vmatprep.subr.mxu0 0.0
    %1353 = vmatpush1.msra.mxu0 %v402
    %1354 = vmatprep.subr.mxu0 0.0
    %1355 = vmatpush1.msra.mxu0 %v403
    %1356 = vmatprep.subr.mxu0 0.0
    %1357 = vmatpush1.msra.mxu0 %v404
    %1358 = vmatprep.subr.mxu0 0.0
    %1359 = vmatpush1.msra.mxu0 %v405
    %1360 = vmatprep.subr.mxu0 0.0
    %1361 = vmatpush1.msra.mxu0 %v406
    %1362 = vmatprep.subr.mxu0 0.0
    %1363 = vmatpush1.msra.mxu0 0.0
    %1364 = vmatprep.subr.mxu0 0.0
    %1365 = vmatpush1.msra.mxu0 0.0
    %1366 = vmatprep.subr.mxu0 0.0
    %1367 = vmatpush1.msra.mxu0 0.0
    %1368 = vmatprep.subr.mxu0 0.0
    %1369 = vmatpush1.msra.mxu0 0.0
    %1370 = vmatprep.subr.mxu0 0.0
    %1371 = vmatpush1.msra.mxu0 0.0
    %1372 = vmatprep.subr.mxu0 0.0
    %1373 = vmatpush1.msra.mxu0 0.0
    %1374 = vmatprep.subr.mxu0 0.0
    %1375 = vmatpush1.msra.mxu0 0.0
    %1376 = vmatprep.subr.mxu0 0.0
    %1377 = vmatpush1.msra.mxu0 0.0
    %1378 = vmatprep.subr.mxu0 0.0
    %1379 = vmatpush1.msra.mxu0 0.0
    %1380 = vmatprep.subr.mxu0 0.0
    %1381 = vmatpush1.msra.mxu0 0.0
    %1382 = vmatprep.subr.mxu0 0.0
    %1383 = vmatpush1.msra.mxu0 0.0
    %1384 = vmatprep.subr.mxu0 0.0
    %1385 = vmatpush1.msra.mxu0 0.0
    %1386 = vmatprep.subr.mxu0 0.0
    %1387 = vmatpush1.msra.mxu0 0.0
    %1388 = vmatprep.subr.mxu0 0.0
    %1389 = vmatpush1.msra.mxu0 0.0
    %1390 = vmatprep.subr.mxu0 0.0
    %1391 = vmatpush1.msra.mxu0 0.0
    %1392 = vmatprep.subr.mxu0 0.0
    %1393 = vmatpush1.msra.mxu0 0.0
    %1394 = vmatprep.subr.mxu0 0.0
    %1395 = vmatpush1.msra.mxu0 0.0
    %1396 = vmatprep.subr.mxu0 0.0
    %1397 = vmatpush1.msra.mxu0 0.0
    %1398 = vmatprep.subr.mxu0 0.0
    %1399 = vmatpush1.msra.mxu0 0.0
    %1400 = vmatprep.subr.mxu0 0.0
    %1401 = vmatpush1.msra.mxu0 0.0
    %1402 = vmatprep.subr.mxu0 0.0
    %1403 = vmatpush1.msra.mxu0 0.0
    %1404 = vmatprep.subr.mxu0 0.0
    %1405 = vmatpush1.msra.mxu0 0.0
    %1406 = vmatprep.subr.mxu0 0.0
    %1407 = vmatpush1.msra.mxu0 0.0
    %1408 = vmatprep.subr.mxu0 0.0
    %1409 = vmatpush1.msra.mxu0 0.0
    %1410 = vmatprep.mubr.f32.mxu0 0.0
    %1411 = vmatmul.mubr.f32.gmra.mrb[0].mxu0 %v1344
    %v1412 = vpop.f32.mrb[0].mxu0
    %v1413 = vadd.f32 %v412, %v1412
    %v1414 = vpop.f32.mrb[0].mxu0
    %1415 = vdwg.mxu0
    %v1416 = vxor.u32 %v1413, 2147483648
    %v1417 = vmul.f32 %v1416, 1.442695
    %v1418 = vpow.pop %v1417
    %v1419 = vadd.f32 %v1418, 1.0
    %v1420 = vrcp.pop %v1419
    %v1421 = vmul.f32 1.0, %v1420
    %1423 = vrot.lane.b32.xlu0 %v1413, 32
    %v1424 = vpop.permute.xlu0 %1423
    %v1426 = vmul.f32 %v1421, %v1424
    %1428 = vrot.lane.b32.xlu0 %v1426, 64
    %v1429 = vpop.permute.xlu0 %1428
    %v1431 = vadd.f32 %v1413, %v1429
    %v1432 = vtanh.pop %v1431
    %v1433 = vsub.f32 1.0, %v1421
    %1435 = vrot.lane.b32.xlu0 %v1432, 96
    %v1436 = vpop.permute.xlu0 %1435
    %v1438 = vmul.f32 %v1433, %v1436
    %v1439 = vmul.f32 %v1421, %v1236
    %v1440 = vadd.f32 %v1438, %v1439
    %v1441 = vsel %vm414, %v1340, 0
    %1443 = vmatprep.subr.mxu0 0.0
    %1444 = vmatpush1.msra.mxu0 %v388
    %1445 = vmatprep.subr.mxu0 0.0
    %1446 = vmatpush1.msra.mxu0 %v389
    %1447 = vmatprep.subr.mxu0 0.0
    %1448 = vmatpush1.msra.mxu0 %v390
    %1449 = vmatprep.subr.mxu0 0.0
    %1450 = vmatpush1.msra.mxu0 %v391
    %1451 = vmatprep.subr.mxu0 0.0
    %1452 = vmatpush1.msra.mxu0 0.0
    %1453 = vmatprep.subr.mxu0 0.0
    %1454 = vmatpush1.msra.mxu0 0.0
    %1455 = vmatprep.subr.mxu0 0.0
    %1456 = vmatpush1.msra.mxu0 0.0
    %1457 = vmatprep.subr.mxu0 0.0
    %1458 = vmatpush1.msra.mxu0 0.0
    %1459 = vmatprep.subr.mxu0 0.0
    %1460 = vmatpush1.msra.mxu0 0.0
    %1461 = vmatprep.subr.mxu0 0.0
    %1462 = vmatpush1.msra.mxu0 0.0
    %1463 = vmatprep.subr.mxu0 0.0
    %1464 = vmatpush1.msra.mxu0 0.0
    %1465 = vmatprep.subr.mxu0 0.0
    %1466 = vmatpush1.msra.mxu0 0.0
    %1467 = vmatprep.subr.mxu0 0.0
    %1468 = vmatpush1.msra.mxu0 0.0
    %1469 = vmatprep.subr.mxu0 0.0
    %1470 = vmatpush1.msra.mxu0 0.0
    %1471 = vmatprep.subr.mxu0 0.0
    %1472 = vmatpush1.msra.mxu0 0.0
    %1473 = vmatprep.subr.mxu0 0.0
    %1474 = vmatpush1.msra.mxu0 0.0
    %1475 = vmatprep.subr.mxu0 0.0
    %1476 = vmatpush1.msra.mxu0 0.0
    %1477 = vmatprep.subr.mxu0 0.0
    %1478 = vmatpush1.msra.mxu0 0.0
    %1479 = vmatprep.subr.mxu0 0.0
    %1480 = vmatpush1.msra.mxu0 0.0
    %1481 = vmatprep.subr.mxu0 0.0
    %1482 = vmatpush1.msra.mxu0 0.0
    %1483 = vmatprep.subr.mxu0 0.0
    %1484 = vmatpush1.msra.mxu0 0.0
    %1485 = vmatprep.subr.mxu0 0.0
    %1486 = vmatpush1.msra.mxu0 0.0
    %1487 = vmatprep.subr.mxu0 0.0
    %1488 = vmatpush1.msra.mxu0 0.0
    %1489 = vmatprep.subr.mxu0 0.0
    %1490 = vmatpush1.msra.mxu0 0.0
    %1491 = vmatprep.subr.mxu0 0.0
    %1492 = vmatpush1.msra.mxu0 0.0
    %1493 = vmatprep.subr.mxu0 0.0
    %1494 = vmatpush1.msra.mxu0 0.0
    %1495 = vmatprep.subr.mxu0 0.0
    %1496 = vmatpush1.msra.mxu0 0.0
    %1497 = vmatprep.subr.mxu0 0.0
    %1498 = vmatpush1.msra.mxu0 0.0
    %1499 = vmatprep.subr.mxu0 0.0
    %1500 = vmatpush1.msra.mxu0 0.0
    %1501 = vmatprep.subr.mxu0 0.0
    %1502 = vmatpush1.msra.mxu0 0.0
    %1503 = vmatprep.subr.mxu0 0.0
    %1504 = vmatpush1.msra.mxu0 0.0
    %1505 = vmatprep.subr.mxu0 0.0
    %1506 = vmatpush1.msra.mxu0 0.0
    %1507 = vmatprep.mubr.f32.mxu0 0.0
    %1508 = vmatmul.mubr.f32.gmra.mrb[0].mxu0 %v1441
    %v1509 = vpop.f32.mrb[0].mxu0
    %v1510 = vadd.f32 %v397, %v1509
    %v1511 = vpop.f32.mrb[0].mxu0
    %1512 = vdwg.mxu0
    %1514 = vrot.lane.b32.xlu0 %v1510, 96
    %v1515 = vpop.permute.xlu0 %1514
    %v1517 = vadd.f32 %v315, %v1515
    %v1518 = vadd.f32 %v384, %v1515
    %v1519 = vxor.u32 %v1517, 2147483648
    %v1520 = vxor.u32 %v1518, 2147483648
    %v1521 = vmul.f32 %v1519, 1.442695
    %v1522 = vpow.pop %v1521
    %v1523 = vmul.f32 %v1520, 1.442695
    %v1524 = vpow.pop %v1523
    %v1525 = vadd.f32 %v1522, 1.0
    %v1526 = vadd.f32 %v1524, 1.0
    %v1527 = vrcp.pop %v1525
    %v1528 = vmul.f32 1.0, %v1527
    %v1529 = vrcp.pop %v1526
    %v1530 = vmul.f32 1.0, %v1529
    %1531 = vrot.lane.b32.xlu0 %v1510, 32
    %v1532 = vpop.permute.xlu0 %1531
    %v1534 = vmul.f32 %v1528, %v1532
    %1536 = vrot.lane.b32.xlu0 %v1534, 64
    %v1537 = vpop.permute.xlu0 %1536
    %v1539 = vadd.f32 %v384, %v1537
    %v1540 = vtanh.pop %v1539
    %v1541 = vsub.f32 1.0, %v1530
    %1543 = vrot.lane.b32.xlu0 %v1540, 96
    %v1544 = vpop.permute.xlu0 %1543
    %v1546 = vmul.f32 %v1541, %v1544
    %v1547 = vmul.f32 %v1530, %v1340
    %v1548 = vadd.f32 %v1546, %v1547
    %v1549 = vsel %vm414, %v1548, %v1440
    %v1551 = vsel %vm519, %v1549, 0
    %1553 = vmatprep.subr.mxu0 0.0
    %1554 = vmatpush1.msra.mxu0 %v399
    %1555 = vmatprep.subr.mxu0 0.0
    %1556 = vmatpush1.msra.mxu0 %v400
    %1557 = vmatprep.subr.mxu0 0.0
    %1558 = vmatpush1.msra.mxu0 %v401
    %1559 = vmatprep.subr.mxu0 0.0
    %1560 = vmatpush1.msra.mxu0 %v402
    %1561 = vmatprep.subr.mxu0 0.0
    %1562 = vmatpush1.msra.mxu0 %v403
    %1563 = vmatprep.subr.mxu0 0.0
    %1564 = vmatpush1.msra.mxu0 %v404
    %1565 = vmatprep.subr.mxu0 0.0
    %1566 = vmatpush1.msra.mxu0 %v405
    %1567 = vmatprep.subr.mxu0 0.0
    %1568 = vmatpush1.msra.mxu0 %v406
    %1569 = vmatprep.subr.mxu0 0.0
    %1570 = vmatpush1.msra.mxu0 0.0
    %1571 = vmatprep.subr.mxu0 0.0
    %1572 = vmatpush1.msra.mxu0 0.0
    %1573 = vmatprep.subr.mxu0 0.0
    %1574 = vmatpush1.msra.mxu0 0.0
    %1575 = vmatprep.subr.mxu0 0.0
    %1576 = vmatpush1.msra.mxu0 0.0
    %1577 = vmatprep.subr.mxu0 0.0
    %1578 = vmatpush1.msra.mxu0 0.0
    %1579 = vmatprep.subr.mxu0 0.0
    %1580 = vmatpush1.msra.mxu0 0.0
    %1581 = vmatprep.subr.mxu0 0.0
    %1582 = vmatpush1.msra.mxu0 0.0
    %1583 = vmatprep.subr.mxu0 0.0
    %1584 = vmatpush1.msra.mxu0 0.0
    %1585 = vmatprep.subr.mxu0 0.0
    %1586 = vmatpush1.msra.mxu0 0.0
    %1587 = vmatprep.subr.mxu0 0.0
    %1588 = vmatpush1.msra.mxu0 0.0
    %1589 = vmatprep.subr.mxu0 0.0
    %1590 = vmatpush1.msra.mxu0 0.0
    %1591 = vmatprep.subr.mxu0 0.0
    %1592 = vmatpush1.msra.mxu0 0.0
    %1593 = vmatprep.subr.mxu0 0.0
    %1594 = vmatpush1.msra.mxu0 0.0
    %1595 = vmatprep.subr.mxu0 0.0
    %1596 = vmatpush1.msra.mxu0 0.0
    %1597 = vmatprep.subr.mxu0 0.0
    %1598 = vmatpush1.msra.mxu0 0.0
    %1599 = vmatprep.subr.mxu0 0.0
    %1600 = vmatpush1.msra.mxu0 0.0
    %1601 = vmatprep.subr.mxu0 0.0
    %1602 = vmatpush1.msra.mxu0 0.0
    %1603 = vmatprep.subr.mxu0 0.0
    %1604 = vmatpush1.msra.mxu0 0.0
    %1605 = vmatprep.subr.mxu0 0.0
    %1606 = vmatpush1.msra.mxu0 0.0
    %1607 = vmatprep.subr.mxu0 0.0
    %1608 = vmatpush1.msra.mxu0 0.0
    %1609 = vmatprep.subr.mxu0 0.0
    %1610 = vmatpush1.msra.mxu0 0.0
    %1611 = vmatprep.subr.mxu0 0.0
    %1612 = vmatpush1.msra.mxu0 0.0
    %1613 = vmatprep.subr.mxu0 0.0
    %1614 = vmatpush1.msra.mxu0 0.0
    %1615 = vmatprep.subr.mxu0 0.0
    %1616 = vmatpush1.msra.mxu0 0.0
    %1617 = vmatprep.mubr.f32.mxu0 0.0
    %1618 = vmatmul.mubr.f32.gmra.mrb[0].mxu0 %v1551
    %v1619 = vpop.f32.mrb[0].mxu0
    %v1620 = vadd.f32 %v412, %v1619
    %v1621 = vpop.f32.mrb[0].mxu0
    %1622 = vdwg.mxu0
    %v1623 = vxor.u32 %v1620, 2147483648
    %v1624 = vmul.f32 %v1623, 1.442695
    %v1625 = vpow.pop %v1624
    %v1626 = vadd.f32 %v1625, 1.0
    %v1627 = vrcp.pop %v1626
    %v1628 = vmul.f32 1.0, %v1627
    %1630 = vrot.lane.b32.xlu0 %v1620, 32
    %v1631 = vpop.permute.xlu0 %1630
    %v1633 = vmul.f32 %v1628, %v1631
    %1635 = vrot.lane.b32.xlu0 %v1633, 64
    %v1636 = vpop.permute.xlu0 %1635
    %v1638 = vadd.f32 %v1620, %v1636
    %v1639 = vtanh.pop %v1638
    %v1640 = vsub.f32 1.0, %v1628
    %1642 = vrot.lane.b32.xlu0 %v1639, 96
    %v1643 = vpop.permute.xlu0 %1642
    %v1645 = vmul.f32 %v1640, %v1643
    %v1646 = vmul.f32 %v1628, %v1440
    %v1647 = vadd.f32 %v1645, %v1646
    %v1649 = vsel %vm414, %v1548, 0
    %1651 = vmatprep.subr.mxu0 0.0
    %1652 = vmatpush1.msra.mxu0 %v388
    %1653 = vmatprep.subr.mxu0 0.0
    %1654 = vmatpush1.msra.mxu0 %v389
    %1655 = vmatprep.subr.mxu0 0.0
    %1656 = vmatpush1.msra.mxu0 %v390
    %1657 = vmatprep.subr.mxu0 0.0
    %1658 = vmatpush1.msra.mxu0 %v391
    %1659 = vmatprep.subr.mxu0 0.0
    %1660 = vmatpush1.msra.mxu0 0.0
    %1661 = vmatprep.subr.mxu0 0.0
    %1662 = vmatpush1.msra.mxu0 0.0
    %1663 = vmatprep.subr.mxu0 0.0
    %1664 = vmatpush1.msra.mxu0 0.0
    %1665 = vmatprep.subr.mxu0 0.0
    %1666 = vmatpush1.msra.mxu0 0.0
    %1667 = vmatprep.subr.mxu0 0.0
    %1668 = vmatpush1.msra.mxu0 0.0
    %1669 = vmatprep.subr.mxu0 0.0
    %1670 = vmatpush1.msra.mxu0 0.0
    %1671 = vmatprep.subr.mxu0 0.0
    %1672 = vmatpush1.msra.mxu0 0.0
    %1673 = vmatprep.subr.mxu0 0.0
    %1674 = vmatpush1.msra.mxu0 0.0
    %1675 = vmatprep.subr.mxu0 0.0
    %1676 = vmatpush1.msra.mxu0 0.0
    %1677 = vmatprep.subr.mxu0 0.0
    %1678 = vmatpush1.msra.mxu0 0.0
    %1679 = vmatprep.subr.mxu0 0.0
    %1680 = vmatpush1.msra.mxu0 0.0
    %1681 = vmatprep.subr.mxu0 0.0
    %1682 = vmatpush1.msra.mxu0 0.0
    %1683 = vmatprep.subr.mxu0 0.0
    %1684 = vmatpush1.msra.mxu0 0.0
    %1685 = vmatprep.subr.mxu0 0.0
    %1686 = vmatpush1.msra.mxu0 0.0
    %1687 = vmatprep.subr.mxu0 0.0
    %1688 = vmatpush1.msra.mxu0 0.0
    %1689 = vmatprep.subr.mxu0 0.0
    %1690 = vmatpush1.msra.mxu0 0.0
    %1691 = vmatprep.subr.mxu0 0.0
    %1692 = vmatpush1.msra.mxu0 0.0
    %1693 = vmatprep.subr.mxu0 0.0
    %1694 = vmatpush1.msra.mxu0 0.0
    %1695 = vmatprep.subr.mxu0 0.0
    %1696 = vmatpush1.msra.mxu0 0.0
    %1697 = vmatprep.subr.mxu0 0.0
    %1698 = vmatpush1.msra.mxu0 0.0
    %1699 = vmatprep.subr.mxu0 0.0
    %1700 = vmatpush1.msra.mxu0 0.0
    %1701 = vmatprep.subr.mxu0 0.0
    %1702 = vmatpush1.msra.mxu0 0.0
    %1703 = vmatprep.subr.mxu0 0.0
    %1704 = vmatpush1.msra.mxu0 0.0
    %1705 = vmatprep.subr.mxu0 0.0
    %1706 = vmatpush1.msra.mxu0 0.0
    %1707 = vmatprep.subr.mxu0 0.0
    %1708 = vmatpush1.msra.mxu0 0.0
    %1709 = vmatprep.subr.mxu0 0.0
    %1710 = vmatpush1.msra.mxu0 0.0
    %1711 = vmatprep.subr.mxu0 0.0
    %1712 = vmatpush1.msra.mxu0 0.0
    %1713 = vmatprep.subr.mxu0 0.0
    %1714 = vmatpush1.msra.mxu0 0.0
    %1715 = vmatprep.mubr.f32.mxu0 0.0
    %1716 = vmatmul.mubr.f32.gmra.mrb[0].mxu0 %v1649
    %v1717 = vpop.f32.mrb[0].mxu0
    %v1718 = vadd.f32 %v397, %v1717
    %v1719 = vpop.f32.mrb[0].mxu0
    %1720 = vdwg.mxu0
    %1722 = vrot.lane.b32.xlu0 %v1718, 64
    %v1723 = vpop.permute.xlu0 %1722
    %v1725 = vadd.f32 %v384, %v1723
    %v1726 = vxor.u32 %v1725, 2147483648
    %v1727 = vmul.f32 %v1726, 1.442695
    %v1728 = vpow.pop %v1727
    %v1729 = vadd.f32 %v1728, 1.0
    %v1730 = vrcp.pop %v1729
    %v1731 = vmul.f32 1.0, %v1730
    %v1732 = vmul.f32 %v1731, %v1718
    %1734 = vrot.lane.b32.xlu0 %v1732, 64
    %v1735 = vpop.permute.xlu0 %1734
    %v1737 = vadd.f32 %v386, %v1735
    %v1738 = vtanh.pop %v1737
    %v1739 = vsub.f32 1.0, %v1731
    %1741 = vrot.lane.b32.xlu0 %v1738, 96
    %v1742 = vpop.permute.xlu0 %1741
    %v1744 = vmul.f32 %v1739, %v1742
    %1745 = vrot.lane.b32.xlu0 %v1548, 96
    %v1746 = vpop.permute.xlu0 %1745
    %v1748 = vmul.f32 %v1731, %v1746
    %v1749 = vadd.f32 %v1744, %v1748
    %1751 = vrot.lane.b32.xlu0 %v1749, 32
    %v1752 = vpop.permute.xlu0 %1751
    %v1754 = vsel %vm414, %v1752, %v1647
    %v1756 = vsel %vm519, %v1754, 0
    %1758 = vmatprep.subr.mxu0 0.0
    %1759 = vmatpush1.msra.mxu0 %v399
    %1760 = vmatprep.subr.mxu0 0.0
    %1761 = vmatpush1.msra.mxu0 %v400
    %1762 = vmatprep.subr.mxu0 0.0
    %1763 = vmatpush1.msra.mxu0 %v401
    %1764 = vmatprep.subr.mxu0 0.0
    %1765 = vmatpush1.msra.mxu0 %v402
    %1766 = vmatprep.subr.mxu0 0.0
    %1767 = vmatpush1.msra.mxu0 %v403
    %1768 = vmatprep.subr.mxu0 0.0
    %1769 = vmatpush1.msra.mxu0 %v404
    %1770 = vmatprep.subr.mxu0 0.0
    %1771 = vmatpush1.msra.mxu0 %v405
    %1772 = vmatprep.subr.mxu0 0.0
    %1773 = vmatpush1.msra.mxu0 %v406
    %1774 = vmatprep.subr.mxu0 0.0
    %1775 = vmatpush1.msra.mxu0 0.0
    %1776 = vmatprep.subr.mxu0 0.0
    %1777 = vmatpush1.msra.mxu0 0.0
    %1778 = vmatprep.subr.mxu0 0.0
    %1779 = vmatpush1.msra.mxu0 0.0
    %1780 = vmatprep.subr.mxu0 0.0
    %1781 = vmatpush1.msra.mxu0 0.0
    %1782 = vmatprep.subr.mxu0 0.0
    %1783 = vmatpush1.msra.mxu0 0.0
    %1784 = vmatprep.subr.mxu0 0.0
    %1785 = vmatpush1.msra.mxu0 0.0
    %1786 = vmatprep.subr.mxu0 0.0
    %1787 = vmatpush1.msra.mxu0 0.0
    %1788 = vmatprep.subr.mxu0 0.0
    %1789 = vmatpush1.msra.mxu0 0.0
    %1790 = vmatprep.subr.mxu0 0.0
    %1791 = vmatpush1.msra.mxu0 0.0
    %1792 = vmatprep.subr.mxu0 0.0
    %1793 = vmatpush1.msra.mxu0 0.0
    %1794 = vmatprep.subr.mxu0 0.0
    %1795 = vmatpush1.msra.mxu0 0.0
    %1796 = vmatprep.subr.mxu0 0.0
    %1797 = vmatpush1.msra.mxu0 0.0
    %1798 = vmatprep.subr.mxu0 0.0
    %1799 = vmatpush1.msra.mxu0 0.0
    %1800 = vmatprep.subr.mxu0 0.0
    %1801 = vmatpush1.msra.mxu0 0.0
    %1802 = vmatprep.subr.mxu0 0.0
    %1803 = vmatpush1.msra.mxu0 0.0
    %1804 = vmatprep.subr.mxu0 0.0
    %1805 = vmatpush1.msra.mxu0 0.0
    %1806 = vmatprep.subr.mxu0 0.0
    %1807 = vmatpush1.msra.mxu0 0.0
    %1808 = vmatprep.subr.mxu0 0.0
    %1809 = vmatpush1.msra.mxu0 0.0
    %1810 = vmatprep.subr.mxu0 0.0
    %1811 = vmatpush1.msra.mxu0 0.0
    %1812 = vmatprep.subr.mxu0 0.0
    %1813 = vmatpush1.msra.mxu0 0.0
    %1814 = vmatprep.subr.mxu0 0.0
    %1815 = vmatpush1.msra.mxu0 0.0
    %1816 = vmatprep.subr.mxu0 0.0
    %1817 = vmatpush1.msra.mxu0 0.0
    %1818 = vmatprep.subr.mxu0 0.0
    %1819 = vmatpush1.msra.mxu0 0.0
    %1820 = vmatprep.subr.mxu0 0.0
    %1821 = vmatpush1.msra.mxu0 0.0
    %1822 = vmatprep.mubr.f32.mxu0 0.0
    %1823 = vmatmul.mubr.f32.gmra.mrb[0].mxu0 %v1756
    %v1824 = vpop.f32.mrb[0].mxu0
    %v1825 = vadd.f32 %v412, %v1824
    %v1826 = vpop.f32.mrb[0].mxu0
    %1827 = vdwg.mxu0
    %v1828 = vxor.u32 %v1825, 2147483648
    %v1829 = vmul.f32 %v1828, 1.442695
    %v1830 = vpow.pop %v1829
    %v1831 = vadd.f32 %v1830, 1.0
    %v1832 = vrcp.pop %v1831
    %v1833 = vmul.f32 1.0, %v1832
    %1835 = vrot.lane.b32.xlu0 %v1825, 32
    %v1836 = vpop.permute.xlu0 %1835
    %v1838 = vmul.f32 %v1833, %v1836
    %1840 = vrot.lane.b32.xlu0 %v1838, 64
    %v1841 = vpop.permute.xlu0 %1840
    %v1843 = vadd.f32 %v1825, %v1841
    %v1844 = vtanh.pop %v1843
    %v1845 = vsub.f32 1.0, %v1833
    %1847 = vrot.lane.b32.xlu0 %v1844, 96
    %v1848 = vpop.permute.xlu0 %1847
    %v1850 = vmul.f32 %v1845, %v1848
    %v1851 = vmul.f32 %v1833, %v1647
    %v1852 = vadd.f32 %v1850, %v1851
    %v1853 = vsel %vm414, %v1752, 0
    %1855 = vmatprep.subr.mxu0 0.0
    %1856 = vmatpush1.msra.mxu0 %v388
    %1857 = vmatprep.subr.mxu0 0.0
    %1858 = vmatpush1.msra.mxu0 %v389
    %1859 = vmatprep.subr.mxu0 0.0
    %1860 = vmatpush1.msra.mxu0 %v390
    %1861 = vmatprep.subr.mxu0 0.0
    %1862 = vmatpush1.msra.mxu0 %v391
    %1863 = vmatprep.subr.mxu0 0.0
    %1864 = vmatpush1.msra.mxu0 0.0
    %1865 = vmatprep.subr.mxu0 0.0
    %1866 = vmatpush1.msra.mxu0 0.0
    %1867 = vmatprep.subr.mxu0 0.0
    %1868 = vmatpush1.msra.mxu0 0.0
    %1869 = vmatprep.subr.mxu0 0.0
    %1870 = vmatpush1.msra.mxu0 0.0
    %1871 = vmatprep.subr.mxu0 0.0
    %1872 = vmatpush1.msra.mxu0 0.0
    %1873 = vmatprep.subr.mxu0 0.0
    %1874 = vmatpush1.msra.mxu0 0.0
    %1875 = vmatprep.subr.mxu0 0.0
    %1876 = vmatpush1.msra.mxu0 0.0
    %1877 = vmatprep.subr.mxu0 0.0
    %1878 = vmatpush1.msra.mxu0 0.0
    %1879 = vmatprep.subr.mxu0 0.0
    %1880 = vmatpush1.msra.mxu0 0.0
    %1881 = vmatprep.subr.mxu0 0.0
    %1882 = vmatpush1.msra.mxu0 0.0
    %1883 = vmatprep.subr.mxu0 0.0
    %1884 = vmatpush1.msra.mxu0 0.0
    %1885 = vmatprep.subr.mxu0 0.0
    %1886 = vmatpush1.msra.mxu0 0.0
    %1887 = vmatprep.subr.mxu0 0.0
    %1888 = vmatpush1.msra.mxu0 0.0
    %1889 = vmatprep.subr.mxu0 0.0
    %1890 = vmatpush1.msra.mxu0 0.0
    %1891 = vmatprep.subr.mxu0 0.0
    %1892 = vmatpush1.msra.mxu0 0.0
    %1893 = vmatprep.subr.mxu0 0.0
    %1894 = vmatpush1.msra.mxu0 0.0
    %1895 = vmatprep.subr.mxu0 0.0
    %1896 = vmatpush1.msra.mxu0 0.0
    %1897 = vmatprep.subr.mxu0 0.0
    %1898 = vmatpush1.msra.mxu0 0.0
    %1899 = vmatprep.subr.mxu0 0.0
    %1900 = vmatpush1.msra.mxu0 0.0
    %1901 = vmatprep.subr.mxu0 0.0
    %1902 = vmatpush1.msra.mxu0 0.0
    %1903 = vmatprep.subr.mxu0 0.0
    %1904 = vmatpush1.msra.mxu0 0.0
    %1905 = vmatprep.subr.mxu0 0.0
    %1906 = vmatpush1.msra.mxu0 0.0
    %1907 = vmatprep.subr.mxu0 0.0
    %1908 = vmatpush1.msra.mxu0 0.0
    %1909 = vmatprep.subr.mxu0 0.0
    %1910 = vmatpush1.msra.mxu0 0.0
    %1911 = vmatprep.subr.mxu0 0.0
    %1912 = vmatpush1.msra.mxu0 0.0
    %1913 = vmatprep.subr.mxu0 0.0
    %1914 = vmatpush1.msra.mxu0 0.0
    %1915 = vmatprep.subr.mxu0 0.0
    %1916 = vmatpush1.msra.mxu0 0.0
    %1917 = vmatprep.subr.mxu0 0.0
    %1918 = vmatpush1.msra.mxu0 0.0
    %1919 = vmatprep.mubr.f32.mxu0 0.0
    %1920 = vmatmul.mubr.f32.gmra.mrb[0].mxu0 %v1853
    %v1921 = vpop.f32.mrb[0].mxu0
    %v1922 = vadd.f32 %v397, %v1921
    %v1923 = vpop.f32.mrb[0].mxu0
    %1924 = vdwg.mxu0
    %1926 = vrot.lane.b32.xlu0 %v1922, 32
    %v1927 = vpop.permute.xlu0 %1926
    %v1929 = vadd.f32 %v386, %v1927
    %v1930 = vxor.u32 %v1929, 2147483648
    %v1931 = vmul.f32 %v1930, 1.442695
    %v1932 = vpow.pop %v1931
    %v1933 = vadd.f32 %v1932, 1.0
    %v1934 = vrcp.pop %v1933
    %v1935 = vmul.f32 1.0, %v1934
    %1936 = vrot.lane.b32.xlu0 %v1922, 96
    %v1937 = vpop.permute.xlu0 %1936
    %v1939 = vmul.f32 %v1935, %v1937
    %1941 = vrot.lane.b32.xlu0 %v1939, 64
    %v1942 = vpop.permute.xlu0 %1941
    %v1944 = vadd.f32 %v386, %v1942
    %v1945 = vtanh.pop %v1944
    %v1946 = vsub.f32 1.0, %v1935
    %1948 = vrot.lane.b32.xlu0 %v1945, 96
    %v1949 = vpop.permute.xlu0 %1948
    %v1951 = vmul.f32 %v1946, %v1949
    %1952 = vrot.lane.b32.xlu0 %v1749, 96
    %v1953 = vpop.permute.xlu0 %1952
    %v1955 = vmul.f32 %v1935, %v1953
    %v1956 = vadd.f32 %v1951, %v1955
    %1958 = vrot.lane.b32.xlu0 %v1956, 64
    %v1959 = vpop.permute.xlu0 %1958
    %v1961 = vsel %vm414, %v1959, %v1852
    %v1963 = vsel %vm519, %v1961, 0
    %1965 = vmatprep.subr.mxu0 0.0
    %1966 = vmatpush1.msra.mxu0 %v399
    %1967 = vmatprep.subr.mxu0 0.0
    %1968 = vmatpush1.msra.mxu0 %v400
    %1969 = vmatprep.subr.mxu0 0.0
    %1970 = vmatpush1.msra.mxu0 %v401
    %1971 = vmatprep.subr.mxu0 0.0
    %1972 = vmatpush1.msra.mxu0 %v402
    %1973 = vmatprep.subr.mxu0 0.0
    %1974 = vmatpush1.msra.mxu0 %v403
    %1975 = vmatprep.subr.mxu0 0.0
    %1976 = vmatpush1.msra.mxu0 %v404
    %1977 = vmatprep.subr.mxu0 0.0
    %1978 = vmatpush1.msra.mxu0 %v405
    %1979 = vmatprep.subr.mxu0 0.0
    %1980 = vmatpush1.msra.mxu0 %v406
    %1981 = vmatprep.subr.mxu0 0.0
    %1982 = vmatpush1.msra.mxu0 0.0
    %1983 = vmatprep.subr.mxu0 0.0
    %1984 = vmatpush1.msra.mxu0 0.0
    %1985 = vmatprep.subr.mxu0 0.0
    %1986 = vmatpush1.msra.mxu0 0.0
    %1987 = vmatprep.subr.mxu0 0.0
    %1988 = vmatpush1.msra.mxu0 0.0
    %1989 = vmatprep.subr.mxu0 0.0
    %1990 = vmatpush1.msra.mxu0 0.0
    %1991 = vmatprep.subr.mxu0 0.0
    %1992 = vmatpush1.msra.mxu0 0.0
    %1993 = vmatprep.subr.mxu0 0.0
    %1994 = vmatpush1.msra.mxu0 0.0
    %1995 = vmatprep.subr.mxu0 0.0
    %1996 = vmatpush1.msra.mxu0 0.0
    %1997 = vmatprep.subr.mxu0 0.0
    %1998 = vmatpush1.msra.mxu0 0.0
    %1999 = vmatprep.subr.mxu0 0.0
    %2000 = vmatpush1.msra.mxu0 0.0
    %2001 = vmatprep.subr.mxu0 0.0
    %2002 = vmatpush1.msra.mxu0 0.0
    %2003 = vmatprep.subr.mxu0 0.0
    %2004 = vmatpush1.msra.mxu0 0.0
    %2005 = vmatprep.subr.mxu0 0.0
    %2006 = vmatpush1.msra.mxu0 0.0
    %2007 = vmatprep.subr.mxu0 0.0
    %2008 = vmatpush1.msra.mxu0 0.0
    %2009 = vmatprep.subr.mxu0 0.0
    %2010 = vmatpush1.msra.mxu0 0.0
    %2011 = vmatprep.subr.mxu0 0.0
    %2012 = vmatpush1.msra.mxu0 0.0
    %2013 = vmatprep.subr.mxu0 0.0
    %2014 = vmatpush1.msra.mxu0 0.0
    %2015 = vmatprep.subr.mxu0 0.0
    %2016 = vmatpush1.msra.mxu0 0.0
    %2017 = vmatprep.subr.mxu0 0.0
    %2018 = vmatpush1.msra.mxu0 0.0
    %2019 = vmatprep.subr.mxu0 0.0
    %2020 = vmatpush1.msra.mxu0 0.0
    %2021 = vmatprep.subr.mxu0 0.0
    %2022 = vmatpush1.msra.mxu0 0.0
    %2023 = vmatprep.subr.mxu0 0.0
    %2024 = vmatpush1.msra.mxu0 0.0
    %2025 = vmatprep.subr.mxu0 0.0
    %2026 = vmatpush1.msra.mxu0 0.0
    %2027 = vmatprep.subr.mxu0 0.0
    %2028 = vmatpush1.msra.mxu0 0.0
    %2029 = vmatprep.mubr.f32.mxu0 0.0
    %2030 = vmatmul.mubr.f32.gmra.mrb[0].mxu0 %v1963
    %v2031 = vpop.f32.mrb[0].mxu0
    %v2032 = vadd.f32 %v412, %v2031
    %v2033 = vpop.f32.mrb[0].mxu0
    %2034 = vdwg.mxu0
    %v2035 = vxor.u32 %v2032, 2147483648
    %v2036 = vmul.f32 %v2035, 1.442695
    %v2037 = vpow.pop %v2036
    %v2038 = vadd.f32 %v2037, 1.0
    %v2039 = vrcp.pop %v2038
    %v2040 = vmul.f32 1.0, %v2039
    %2042 = vrot.lane.b32.xlu0 %v2032, 32
    %v2043 = vpop.permute.xlu0 %2042
    %v2045 = vmul.f32 %v2040, %v2043
    %2047 = vrot.lane.b32.xlu0 %v2045, 64
    %v2048 = vpop.permute.xlu0 %2047
    %v2050 = vadd.f32 %v2032, %v2048
    %v2051 = vtanh.pop %v2050
    %v2052 = vsub.f32 1.0, %v2040
    %2054 = vrot.lane.b32.xlu0 %v2051, 96
    %v2055 = vpop.permute.xlu0 %2054
    %v2057 = vmul.f32 %v2052, %v2055
    %v2058 = vmul.f32 %v2040, %v1852
    %v2059 = vadd.f32 %v2057, %v2058
    %2061 = vrot.lane.b32.xlu0 %v617, 96
    %v2062 = vpop.permute.xlu0 %2061
    %2065 = vrot.lane.b32.xlu0 %v1029, 32
    %v2066 = vpop.permute.xlu0 %2065
    %2069 = vrot.lane.b32.xlu0 %v1236, 64
    %v2070 = vpop.permute.xlu0 %2069
    %2073 = vrot.lane.b32.xlu0 %v1440, 96
    %v2074 = vpop.permute.xlu0 %2073
    %2077 = vrot.lane.b32.xlu0 %v1852, 32
    %v2078 = vpop.permute.xlu0 %2077
    %2081 = vrot.lane.b32.xlu0 %v2059, 64
    %v2082 = vpop.permute.xlu0 %2081
    %v2084 = vsel %vm414, %v2062, %v824
    %v2085 = vsel %vm519, %v2084, %v2066
    %vm2086 = vcmask 785408
    %v2087 = vsel %vm2086, %v2085, %v2070
    %v2088 = vsel %vm414, %v2074, %v1647
    %v2089 = vsel %vm519, %v2088, %v2078
    %v2090 = vsel %vm2086, %v2089, %v2082
    %v2091 = vld [vmem:[%s7] sm:$0xff]
    %v2092 = vld [vmem:[%s7 + $0x8] sm:$0xff]
    %v2093 = vld [vmem:[%s7 + $0x10] sm:$0xff]
    %v2094 = vld [vmem:[%s7 + $0x18] sm:$0xff]
    %v2095 = vld [vmem:[%s7 + $0x20] sm:$0xff]
    %v2096 = vld [vmem:[%s7 + $0x28] sm:$0xff]
    %v2097 = vld [vmem:[%s7 + $0x30] sm:$0xff]
    %v2098 = vld [vmem:[%s7 + $0x38] sm:$0xff]
    %v2099 = vld [vmem:[%s7 + $0x40] sm:$0xff]
    %v2100 = vld [vmem:[%s7 + $0x48] sm:$0xff]
    %v2101 = vld [vmem:[%s7 + $0x50] sm:$0xff]
    %v2102 = vld [vmem:[%s7 + $0x58] sm:$0xff]
    %v2103 = vld [vmem:[%s7 + $0x60] sm:$0xff]
    %v2104 = vld [vmem:[%s7 + $0x68] sm:$0xff]
    %v2105 = vld [vmem:[%s7 + $0x70] sm:$0xff]
    %v2106 = vld [vmem:[%s7 + $0x78] sm:$0xff]
    %v2107 = vld [vmem:[%s7 + $0x80] sm:$0xff]
    %v2108 = vld [vmem:[%s7 + $0x88] sm:$0xff]
    %v2109 = vld [vmem:[%s7 + $0x90] sm:$0xff]
    %v2110 = vld [vmem:[%s7 + $0x98] sm:$0xff]
    %v2111 = vld [vmem:[%s7 + $0xa0] sm:$0xff]
    %v2112 = vld [vmem:[%s7 + $0xa8] sm:$0xff]
    %v2113 = vld [vmem:[%s7 + $0xb0] sm:$0xff]
    %v2114 = vld [vmem:[%s7 + $0xb8] sm:$0xff]
    %v2115 = vld [vmem:[%s7 + $0xc0] sm:$0xff]
    %v2116 = vld [vmem:[%s7 + $0xc8] sm:$0xff]
    %v2117 = vld [vmem:[%s7 + $0xd0] sm:$0xff]
    %v2118 = vld [vmem:[%s7 + $0xd8] sm:$0xff]
    %v2119 = vld [vmem:[%s7 + $0xe0] sm:$0xff]
    %v2120 = vld [vmem:[%s7 + $0xe8] sm:$0xff]
    %v2121 = vld [vmem:[%s7 + $0xf0] sm:$0xff]
    %v2122 = vld [vmem:[%s7 + $0xf8] sm:$0xff]
    %v2123 = vld [vmem:[%s8] sm:$0x1]
    %v2125 = vlaneseq
    %v2126 = vshrl.u32 %v2125, 7
    %v2127 = vsub.s32 0, %v2126
    %v2128 = vrot.slane %v2123, %v2127
    %2130 = vmatprep.subr.mxu0 0.0
    %2131 = vmatpush1.msra.mxu0 %v2091
    %2132 = vmatprep.subr.mxu0 0.0
    %2133 = vmatpush1.msra.mxu0 %v2092
    %2134 = vmatprep.subr.mxu0 0.0
    %2135 = vmatpush1.msra.mxu0 %v2093
    %2136 = vmatprep.subr.mxu0 0.0
    %2137 = vmatpush1.msra.mxu0 %v2094
    %2138 = vmatprep.subr.mxu0 0.0
    %2139 = vmatpush1.msra.mxu0 %v2095
    %2140 = vmatprep.subr.mxu0 0.0
    %2141 = vmatpush1.msra.mxu0 %v2096
    %2142 = vmatprep.subr.mxu0 0.0
    %2143 = vmatpush1.msra.mxu0 %v2097
    %2144 = vmatprep.subr.mxu0 0.0
    %2145 = vmatpush1.msra.mxu0 %v2098
    %2146 = vmatprep.subr.mxu0 0.0
    %2147 = vmatpush1.msra.mxu0 %v2099
    %2148 = vmatprep.subr.mxu0 0.0
    %2149 = vmatpush1.msra.mxu0 %v2100
    %2150 = vmatprep.subr.mxu0 0.0
    %2151 = vmatpush1.msra.mxu0 %v2101
    %2152 = vmatprep.subr.mxu0 0.0
    %2153 = vmatpush1.msra.mxu0 %v2102
    %2154 = vmatprep.subr.mxu0 0.0
    %2155 = vmatpush1.msra.mxu0 %v2103
    %2156 = vmatprep.subr.mxu0 0.0
    %2157 = vmatpush1.msra.mxu0 %v2104
    %2158 = vmatprep.subr.mxu0 0.0
    %2159 = vmatpush1.msra.mxu0 %v2105
    %2160 = vmatprep.subr.mxu0 0.0
    %2161 = vmatpush1.msra.mxu0 %v2106
    %2162 = vmatprep.subr.mxu0 0.0
    %2163 = vmatpush1.msra.mxu0 %v2107
    %2164 = vmatprep.subr.mxu0 0.0
    %2165 = vmatpush1.msra.mxu0 %v2108
    %2166 = vmatprep.subr.mxu0 0.0
    %2167 = vmatpush1.msra.mxu0 %v2109
    %2168 = vmatprep.subr.mxu0 0.0
    %2169 = vmatpush1.msra.mxu0 %v2110
    %2170 = vmatprep.subr.mxu0 0.0
    %2171 = vmatpush1.msra.mxu0 %v2111
    %2172 = vmatprep.subr.mxu0 0.0
    %2173 = vmatpush1.msra.mxu0 %v2112
    %2174 = vmatprep.subr.mxu0 0.0
    %2175 = vmatpush1.msra.mxu0 %v2113
    %2176 = vmatprep.subr.mxu0 0.0
    %2177 = vmatpush1.msra.mxu0 %v2114
    %2178 = vmatprep.subr.mxu0 0.0
    %2179 = vmatpush1.msra.mxu0 %v2115
    %2180 = vmatprep.subr.mxu0 0.0
    %2181 = vmatpush1.msra.mxu0 %v2116
    %2182 = vmatprep.subr.mxu0 0.0
    %2183 = vmatpush1.msra.mxu0 %v2117
    %2184 = vmatprep.subr.mxu0 0.0
    %2185 = vmatpush1.msra.mxu0 %v2118
    %2186 = vmatprep.subr.mxu0 0.0
    %2187 = vmatpush1.msra.mxu0 %v2119
    %2188 = vmatprep.subr.mxu0 0.0
    %2189 = vmatpush1.msra.mxu0 %v2120
    %2190 = vmatprep.subr.mxu0 0.0
    %2191 = vmatpush1.msra.mxu0 %v2121
    %2192 = vmatprep.subr.mxu0 0.0
    %2193 = vmatpush1.msra.mxu0 %v2122
    %2194 = vmatprep.mubr.f32.mxu0 %v2090
    %2195 = vmatmul.mubr.f32.gmra.mrb[0].mxu0 %v2087
    %v2196 = vpop.f32.mrb[0].mxu0
    %v2197 = vadd.f32 %v2128, %v2196
    %v2198 = vpop.f32.mrb[0].mxu0
    %2199 = vdwg.mxu0
    %2200 = vst.msk [vmem:[%s9] sm:$0xff] %vm519, %v2197
    // Predicated region
    $region42: #{filmgen_forward.1} parent=1 // pred_check
      _
    $region43: #{filmgen_forward.1} parent=1 // pred_check_branch
      %2202 = sbr.rel (0) target = $region45
    $region44: #{filmgen_forward.1} parent=1 // pred_region
      _
    $region45: #{filmgen_forward.1} parent=1 // pred_fallthru
      _
    // Predicated region
    $region46: #{filmgen_forward.1} parent=1 // pred_check
      _
    $region47: #{filmgen_forward.1} parent=1 // pred_check_branch
      %2204 = sbr.rel (0) target = $region49
    $region48: #{filmgen_forward.1} parent=1 // pred_region
      _
    $region49: #{filmgen_forward.1} parent=1 // pred_fallthru
      _
    %2205 = vsyncpa [#allocation3], 1

</llo_original>
